<compile_context>
chip_gen: v7x
topology: tpu7x:2x2x1
jax: 0.10.0
libtpu: 0.0.40
codegen_flags: <defaults>
</compile_context>

<pallas_src>
import jax
import jax.numpy as jnp
from jax.experimental import pallas as pl
from jax.experimental.pallas import tpu as pltpu

# ---------------- hyperparameters (stand-ins for the module's globals) -------
K_LAST_FRAMES = 3
COLS = 16
ROWS = 16
C_IN = K_LAST_FRAMES + 1            # 4
C1 = 2 * (K_LAST_FRAMES + 1)        # 8
C2 = 4 * (K_LAST_FRAMES + 1)        # 16
KH = KW = 3
OH2, OW2 = ROWS - 4, COLS - 4       # 12, 12 (after two VALID 3x3 convs)
FC1_IN = C2 * OH2 * OW2             # 2304
FC1_OUT, FC2_OUT, FC3_OUT = 120, 84, 6
NPAD = 128                          # lane-dense padded width for all fc dims

HW = ROWS * COLS                    # 256 flattened spatial (lane axis)
PAD = (KH - 1) * COLS + (KW - 1)    # 34: max tap shift (di*16 + dj)
N1 = 384                            # conv1 output lanes: HW + PAD rounded to 3*128
SHIFTS = tuple(di * COLS + dj for di in range(KH) for dj in range(KW))  # t = di*3+dj
NTAP = len(SHIFTS)                  # 9

_VMEM = pltpu.MemorySpace.VMEM


def _silu(v):
    # f32 elementwise; exp goes to the EUP, everything else to the VPU.
    return v * (1.0 / (1.0 + jnp.exp(-v)))


# ---------------- fused forward kernel ---------------------------------------
def _dqn_fused_kernel(xim_ref, w1_ref, b1_ref, w2_ref, b2_ref,
                      wfc1_hbm, wfc2_ref, wfc3_ref, o_ref,
                      wfc1_vmem, wfc1_sem):
    f32, bf16 = jnp.float32, jnp.bfloat16

    # Start the big (~1 MB) fc1-weight DMA first so it overlaps the conv compute;
    # everything else (<100 KB) was auto-copied into VMEM by pallas_call.
    wfc1_cp = pltpu.make_async_copy(wfc1_hbm, wfc1_vmem, wfc1_sem)
    wfc1_cp.start()

    # ---- conv1: single tap-stacked matmul over the host-built im2col.
    # xim rows are (tap, in-channel)-major, 384 output lanes so h1 stays wide
    # enough for conv2's shifted reads; out-of-valid lanes are finite don't-cares
    # (the input padding is zeros).
    h1 = jnp.dot(w1_ref[...], xim_ref[...], preferred_element_type=f32)  # (8, 384)
    h1 = jnp.maximum(h1 + b1_ref[...], 0.0)                              # f32

    # ---- conv2: stack the 9 shifted h1 views along sublanes (value slices ->
    # XLU lane rotates, no VMEM store/reload) and do one (16,72) @ (72,256) dot.
    stk = jnp.concatenate([h1[:, s:s + HW] for s in SHIFTS], axis=0)     # (72, 256)
    h2 = jnp.dot(w2_ref[...], stk.astype(bf16), preferred_element_type=f32)
    h2 = jnp.maximum(h2 + b2_ref[...], 0.0)                              # (16, 256)

    # ---- fc1: wait for the overlapped weight DMA, then one batched matmul over
    # the channel axis followed by a channel-sum.  wfc1[c] is (HW, 128), zero
    # outside the 12x12 valid window and beyond column 120, so the don't-care
    # positions of h2 and the padded fc lanes contribute exactly 0.
    wfc1_cp.wait()
    f1cb = jax.lax.dot_general(
        h2[:, None, :].astype(bf16),          # (16, 1, 256)
        wfc1_vmem[...],                       # (16, 256, 128)
        dimension_numbers=(((2,), (1,)), ((0,), (0,))),
        preferred_element_type=f32)           # (16, 1, 128)
    f1 = _silu(jnp.sum(f1cb, axis=0))         # (1, 128) f32

    # ---- fc2 / fc3 on 128x128 zero-padded weights: unmasked lane-dense dots,
    # lane-dense (1, 128) output (real logits live in the first 6 columns).
    f2 = _silu(jnp.dot(f1.astype(bf16), wfc2_ref[...], preferred_element_type=f32))
    o_ref[...] = jnp.dot(f2.astype(bf16), wfc3_ref[...], preferred_element_type=f32)


# ---------------- host wrapper ------------------------------------------------
@jax.jit
def deep_q_forward(x_nchw, params):
    assert x_nchw.shape == (1, C_IN, ROWS, COLS), \
        "torch.flatten(x) in the reference implies batch=1"
    # Channel-major, flattened-spatial layout, zero-padded so every shifted read
    # (p -> p + di*COLS + dj) used by the im2col below is in bounds.
    x2d = x_nchw.reshape(C_IN, HW).astype(jnp.float32)
    xp = jnp.pad(x2d, ((0, 0), (0, N1 + PAD - HW)))                # (4, 418)
    # Host-side im2col for conv1: tap-major stacking of the 9 shifted views.
    xim = jnp.concatenate([xp[:, s:s + N1] for s in SHIFTS], axis=0)  # (36, 384)
    xim = xim.astype(jnp.bfloat16)

    out = pl.pallas_call(
        _dqn_fused_kernel,
        out_shape=jax.ShapeDtypeStruct((1, NPAD), jnp.float32),
        in_specs=[pl.BlockSpec(memory_space=_VMEM)] * 5           # xim, w1, b1, w2, b2
                 + [pl.BlockSpec(memory_space=pl.ANY)]            # wfc1 stays in HBM
                 + [pl.BlockSpec(memory_space=_VMEM)] * 2,        # wfc2, wfc3
        out_specs=pl.BlockSpec(memory_space=_VMEM),
        scratch_shapes=[pltpu.VMEM((C2, HW, NPAD), jnp.bfloat16), # wfc1 landing buffer
                        pltpu.SemaphoreType.DMA(())],
    )(xim, params["w1"], params["b1"], params["w2"], params["b2"],
      params["wfc1"], params["wfc2"], params["wfc3"])
    return out[0, :FC3_OUT]                                       # (6,)


# ---------------- deterministic parameter init --------------------------------
def init_params(key):
    ks = jax.random.split(key, 7)
    conv1_w = jax.random.normal(ks[0], (C1, C_IN, KH, KW), jnp.float32) * 0.1
    conv1_b = jax.random.normal(ks[1], (C1,), jnp.float32) * 0.1
    conv2_w = jax.random.normal(ks[2], (C2, C1, KH, KW), jnp.float32) * 0.1
    conv2_b = jax.random.normal(ks[3], (C2,), jnp.float32) * 0.1
    fc1_w = jax.random.normal(ks[4], (FC1_OUT, FC1_IN), jnp.float32) * 0.02
    fc2_w = jax.random.normal(ks[5], (FC2_OUT, FC1_OUT), jnp.float32) * 0.1
    fc3_w = jax.random.normal(ks[6], (FC3_OUT, FC2_OUT), jnp.float32) * 0.1

    q = lambda w: w.astype(jnp.bfloat16)          # matmul weights live in bf16

    # Conv weights -> tap-stacked matmul form, (tap, in-channel)-major along K,
    # matching the tap-major row stacking of the conv operands in the kernel.
    w1 = q(jnp.transpose(conv1_w, (0, 2, 3, 1)).reshape(C1, NTAP * C_IN))   # (8, 36)
    w2 = q(jnp.transpose(conv2_w, (0, 2, 3, 1)).reshape(C2, NTAP * C1))     # (16, 72)

    # fc1: (120, 2304) with torch (c,h,w) flatten order -> per-channel (HW, 128)
    # slabs, zero-padded spatially to the full 16x16 grid and 120 -> 128 columns.
    f1 = fc1_w.reshape(FC1_OUT, C2, OH2, OW2)
    f1 = jnp.pad(f1, ((0, NPAD - FC1_OUT), (0, 0),
                      (0, ROWS - OH2), (0, COLS - OW2)))          # (128, 16, 16, 16)
    wfc1 = q(jnp.transpose(f1.reshape(NPAD, C2, HW), (1, 2, 0)))  # (16, 256, 128)

    # fc2 / fc3: transposed and zero-padded to 128x128 (unmasked lane-dense dots).
    wfc2 = jnp.zeros((NPAD, NPAD), jnp.float32).at[:FC1_OUT, :FC2_OUT].set(fc2_w.T)
    wfc3 = jnp.zeros((NPAD, NPAD), jnp.float32).at[:FC2_OUT, :FC3_OUT].set(fc3_w.T)

    params = {
        "w1": w1, "b1": conv1_b.reshape(C1, 1).astype(jnp.float32),
        "w2": w2, "b2": conv2_b.reshape(C2, 1).astype(jnp.float32),
        "wfc1": wfc1, "wfc2": q(wfc2), "wfc3": q(wfc3),
    }

    # Reference weights: the SAME bf16-quantized values, dequantized to f32, so
    # the check isolates the kernel's math (layout / conv decomposition / fusion);
    # error vs. the original f32 torch weights would be larger (bf16 quantization).
    deq = lambda w: w.astype(jnp.bfloat16).astype(jnp.float32)
    raw_q = (deq(conv1_w), conv1_b, deq(conv2_w), conv2_b,
             deq(fc1_w), deq(fc2_w), deq(fc3_w))
    return params, raw_q


# ---------------- pure-JAX reference (numeric sanity check) -------------------
def reference_forward(x_nchw, raw):
    conv1_w, conv1_b, conv2_w, conv2_b, fc1_w, fc2_w, fc3_w = raw
    dn = ("NCHW", "OIHW", "NCHW")
    hp = jax.lax.Precision.HIGHEST
    y = jax.lax.conv_general_dilated(x_nchw, conv1_w, (1, 1), "VALID",
                                     dimension_numbers=dn, precision=hp)
    y = jnp.maximum(y + conv1_b[None, :, None, None], 0.0)
    y = jax.lax.conv_general_dilated(y, conv2_w, (1, 1), "VALID",
                                     dimension_numbers=dn, precision=hp)
    y = jnp.maximum(y + conv2_b[None, :, None, None], 0.0)
    f = y.reshape(-1)                                            # torch.flatten order

    silu = lambda v: v * jax.nn.sigmoid(v)
    f = silu(jnp.dot(fc1_w, f, precision=hp))
    f = silu(jnp.dot(fc2_w, f, precision=hp))
    return jnp.dot(fc3_w, f, precision=hp)


# ---------------- main ---------------------------------------------------------
if __name__ == "__main__":
    key = jax.random.PRNGKey(0)
    k_x, k_p = jax.random.split(key)
    x = jax.random.normal(k_x, (1, C_IN, ROWS, COLS), jnp.float32)  # NCHW, batch=1

    params, raw_q = init_params(k_p)

    out = jax.block_until_ready(deep_q_forward(x, params))
    assert out.shape == (FC3_OUT,)

    ref = jax.block_until_ready(reference_forward(x, raw_q))
    rel_err = float(jnp.max(jnp.abs(out - ref)) / (jnp.max(jnp.abs(ref)) + 1e-6))
    assert rel_err < 2e-2, f"mismatch vs reference, rel_err={rel_err}"

    print("KERNEL_OK")
</pallas_src>

<mosaic_0001>
module attributes {stable_mosaic.version = 11 : i64} {
  func.func @_dqn_fused_kernel(%arg0: memref<36x384xbf16, #tpu.memory_space<vmem>>, %arg1: memref<8x36xbf16, #tpu.memory_space<vmem>>, %arg2: memref<8x1xf32, #tpu.memory_space<vmem>>, %arg3: memref<16x72xbf16, #tpu.memory_space<vmem>>, %arg4: memref<16x1xf32, #tpu.memory_space<vmem>>, %arg5: memref<16x256x128xbf16, #tpu.memory_space<any>>, %arg6: memref<128x128xbf16, #tpu.memory_space<vmem>>, %arg7: memref<128x128xbf16, #tpu.memory_space<vmem>>, %arg8: memref<1x128xf32, #tpu.memory_space<vmem>>, %arg9: memref<16x256x128xbf16, #tpu.memory_space<vmem>>, %arg10: memref<!tpu.dma_semaphore, #tpu.memory_space<semaphore_mem>>) attributes {dimension_semantics = [], scalar_prefetch = 0 : i64, scratch_operands = 2 : i64, tpu.core_type = #tpu.core_type<tc>} {
    tpu.enqueue_dma source(%arg5 : memref<16x256x128xbf16, #tpu.memory_space<any>>) target(%arg9 : memref<16x256x128xbf16, #tpu.memory_space<vmem>>) target_semaphore(%arg10 : memref<!tpu.dma_semaphore, #tpu.memory_space<semaphore_mem>>)
    %c0 = arith.constant 0 : index
    %c0_0 = arith.constant 0 : index
    %0 = vector.load %arg1[%c0, %c0_0] : memref<8x36xbf16, #tpu.memory_space<vmem>>, vector<8x36xbf16>
    %c0_1 = arith.constant 0 : index
    %c0_2 = arith.constant 0 : index
    %1 = vector.load %arg0[%c0_1, %c0_2] : memref<36x384xbf16, #tpu.memory_space<vmem>>, vector<36x384xbf16>
    %cst = arith.constant dense<0.000000e+00> : vector<8x384xf32>
    %2 = tpu.matmul %0, %1, %cst {dimension_numbers = #tpu.dot_dimension_numbers<[1], [0], [0], [1], [0, 0, 1, 1], [], []>} : vector<8x36xbf16>, vector<36x384xbf16>, vector<8x384xf32> -> vector<8x384xf32>
    %c0_3 = arith.constant 0 : index
    %c0_4 = arith.constant 0 : index
    %3 = vector.load %arg2[%c0_3, %c0_4] : memref<8x1xf32, #tpu.memory_space<vmem>>, vector<8x1xf32>
    %4 = vector.broadcast %3 : vector<8x1xf32> to vector<8x384xf32>
    %5 = arith.addf %2, %4 : vector<8x384xf32>
    %cst_5 = arith.constant 0.000000e+00 : f32
    %6 = vector.broadcast %cst_5 : f32 to vector<8x384xf32>
    %7 = arith.maximumf %5, %6 : vector<8x384xf32>
    %8 = vector.extract_strided_slice %7 {offsets = [0, 0], sizes = [8, 256], strides = [1, 1]} : vector<8x384xf32> to vector<8x256xf32>
    %9 = vector.extract_strided_slice %7 {offsets = [0, 1], sizes = [8, 256], strides = [1, 1]} : vector<8x384xf32> to vector<8x256xf32>
    %10 = vector.extract_strided_slice %7 {offsets = [0, 2], sizes = [8, 256], strides = [1, 1]} : vector<8x384xf32> to vector<8x256xf32>
    %11 = vector.extract_strided_slice %7 {offsets = [0, 16], sizes = [8, 256], strides = [1, 1]} : vector<8x384xf32> to vector<8x256xf32>
    %12 = vector.extract_strided_slice %7 {offsets = [0, 17], sizes = [8, 256], strides = [1, 1]} : vector<8x384xf32> to vector<8x256xf32>
    %13 = vector.extract_strided_slice %7 {offsets = [0, 18], sizes = [8, 256], strides = [1, 1]} : vector<8x384xf32> to vector<8x256xf32>
    %14 = vector.extract_strided_slice %7 {offsets = [0, 32], sizes = [8, 256], strides = [1, 1]} : vector<8x384xf32> to vector<8x256xf32>
    %15 = vector.extract_strided_slice %7 {offsets = [0, 33], sizes = [8, 256], strides = [1, 1]} : vector<8x384xf32> to vector<8x256xf32>
    %16 = vector.extract_strided_slice %7 {offsets = [0, 34], sizes = [8, 256], strides = [1, 1]} : vector<8x384xf32> to vector<8x256xf32>
    %17 = tpu.concatenate %8, %9, %10, %11, %12, %13, %14, %15, %16 in 0 : vector<8x256xf32>, vector<8x256xf32>, vector<8x256xf32>, vector<8x256xf32>, vector<8x256xf32>, vector<8x256xf32>, vector<8x256xf32>, vector<8x256xf32>, vector<8x256xf32> -> vector<72x256xf32>
    %c0_6 = arith.constant 0 : index
    %c0_7 = arith.constant 0 : index
    %18 = vector.load %arg3[%c0_6, %c0_7] : memref<16x72xbf16, #tpu.memory_space<vmem>>, vector<16x72xbf16>
    %19 = arith.truncf %17 : vector<72x256xf32> to vector<72x256xbf16>
    %cst_8 = arith.constant dense<0.000000e+00> : vector<16x256xf32>
    %20 = tpu.matmul %18, %19, %cst_8 {dimension_numbers = #tpu.dot_dimension_numbers<[1], [0], [0], [1], [0, 0, 1, 1], [], []>} : vector<16x72xbf16>, vector<72x256xbf16>, vector<16x256xf32> -> vector<16x256xf32>
    %c0_9 = arith.constant 0 : index
    %c0_10 = arith.constant 0 : index
    %21 = vector.load %arg4[%c0_9, %c0_10] : memref<16x1xf32, #tpu.memory_space<vmem>>, vector<16x1xf32>
    %22 = vector.broadcast %21 : vector<16x1xf32> to vector<16x256xf32>
    %23 = arith.addf %20, %22 : vector<16x256xf32>
    %cst_11 = arith.constant 0.000000e+00 : f32
    %24 = vector.broadcast %cst_11 : f32 to vector<16x256xf32>
    %25 = arith.maximumf %23, %24 : vector<16x256xf32>
    tpu.wait_dma2 semaphore(%arg10 : memref<!tpu.dma_semaphore, #tpu.memory_space<semaphore_mem>>) src(%arg5 : memref<16x256x128xbf16, #tpu.memory_space<any>>) dst(%arg9 : memref<16x256x128xbf16, #tpu.memory_space<vmem>>)
    %26 = vector.shape_cast %25 : vector<16x256xf32> to vector<16x1x256xf32>
    %27 = arith.truncf %26 : vector<16x1x256xf32> to vector<16x1x256xbf16>
    %c0_12 = arith.constant 0 : index
    %c0_13 = arith.constant 0 : index
    %c0_14 = arith.constant 0 : index
    %28 = vector.load %arg9[%c0_12, %c0_13, %c0_14] : memref<16x256x128xbf16, #tpu.memory_space<vmem>>, vector<16x256x128xbf16>
    %cst_15 = arith.constant dense<0.000000e+00> : vector<16x1x128xf32>
    %29 = tpu.matmul %27, %28, %cst_15 {dimension_numbers = #tpu.dot_dimension_numbers<[2], [1], [1], [2], [0, 0, 0, 1, 1, 2], [0], [0]>} : vector<16x1x256xbf16>, vector<16x256x128xbf16>, vector<16x1x128xf32> -> vector<16x1x128xf32>
    %cst_16 = arith.constant dense<0.000000e+00> : vector<1x128xf32>
    %30 = vector.multi_reduction <add>, %29, %cst_16 [0] : vector<16x1x128xf32> to vector<1x128xf32>
    %cst_17 = arith.constant 0.000000e+00 : f32
    %31 = vector.broadcast %cst_17 : f32 to vector<1x128xf32>
    %32 = arith.subf %31, %30 : vector<1x128xf32>
    %33 = math.exp %32 : vector<1x128xf32>
    %cst_18 = arith.constant 1.000000e+00 : f32
    %34 = vector.broadcast %cst_18 : f32 to vector<1x128xf32>
    %35 = arith.addf %34, %33 : vector<1x128xf32>
    %cst_19 = arith.constant 1.000000e+00 : f32
    %36 = vector.broadcast %cst_19 : f32 to vector<1x128xf32>
    %37 = arith.divf %36, %35 : vector<1x128xf32>
    %38 = arith.mulf %30, %37 : vector<1x128xf32>
    %39 = arith.truncf %38 : vector<1x128xf32> to vector<1x128xbf16>
    %c0_20 = arith.constant 0 : index
    %c0_21 = arith.constant 0 : index
    %40 = vector.load %arg6[%c0_20, %c0_21] : memref<128x128xbf16, #tpu.memory_space<vmem>>, vector<128x128xbf16>
    %cst_22 = arith.constant dense<0.000000e+00> : vector<1x128xf32>
    %41 = tpu.matmul %39, %40, %cst_22 {dimension_numbers = #tpu.dot_dimension_numbers<[1], [0], [0], [1], [0, 0, 1, 1], [], []>} : vector<1x128xbf16>, vector<128x128xbf16>, vector<1x128xf32> -> vector<1x128xf32>
    %cst_23 = arith.constant 0.000000e+00 : f32
    %42 = vector.broadcast %cst_23 : f32 to vector<1x128xf32>
    %43 = arith.subf %42, %41 : vector<1x128xf32>
    %44 = math.exp %43 : vector<1x128xf32>
    %cst_24 = arith.constant 1.000000e+00 : f32
    %45 = vector.broadcast %cst_24 : f32 to vector<1x128xf32>
    %46 = arith.addf %45, %44 : vector<1x128xf32>
    %cst_25 = arith.constant 1.000000e+00 : f32
    %47 = vector.broadcast %cst_25 : f32 to vector<1x128xf32>
    %48 = arith.divf %47, %46 : vector<1x128xf32>
    %49 = arith.mulf %41, %48 : vector<1x128xf32>
    %50 = arith.truncf %49 : vector<1x128xf32> to vector<1x128xbf16>
    %c0_26 = arith.constant 0 : index
    %c0_27 = arith.constant 0 : index
    %51 = vector.load %arg7[%c0_26, %c0_27] : memref<128x128xbf16, #tpu.memory_space<vmem>>, vector<128x128xbf16>
    %cst_28 = arith.constant dense<0.000000e+00> : vector<1x128xf32>
    %52 = tpu.matmul %50, %51, %cst_28 {dimension_numbers = #tpu.dot_dimension_numbers<[1], [0], [0], [1], [0, 0, 1, 1], [], []>} : vector<1x128xbf16>, vector<128x128xbf16>, vector<1x128xf32> -> vector<1x128xf32>
    %c0_29 = arith.constant 0 : index
    %c0_30 = arith.constant 0 : index
    %53 = vector.load %arg8[%c0_29, %c0_30] : memref<1x128xf32, #tpu.memory_space<vmem>>, vector<1x128xf32>
    tpu.vector_store %arg8[%c0_29, %c0_30], %52 {strides = array<i32>} : memref<1x128xf32, #tpu.memory_space<vmem>>, vector<1x128xf32>,
    return
  }
}

</mosaic_0001>

<llo_original>
// kernel: deep_q_forward.1
$region0: #{deep_q_forward.1}
  #allocation0 [shape = 'u32[]', space=smem, size = 0x4, offset = 0x4, fixed_abs, tag = 'smem constant byte address 0x4 - core index']
  #allocation1 [shape = 'u32[144,128]{1,0:T(1,128)}', space=vmem, size = 0x12000, scoped, tag = 'internal scratch']
  #allocation2 [shape = 'bf16[16,256,128]{2,1,0:T(16,128)(2,1)}', space=vmem, size = 0x100000, scoped, tag = 'scratch operand']
  #allocation3 [shape = 's32[1]{0}', space=sflag, size = 0x4, scoped, tag = 'scratch operand']
  #allocation4 [shape = 's32[]', space=sflag, size = 0x4, offset = 0, fixed_abs, tag = 'sflag constant byte address 0x0 - dummy sync flag']
  #allocation5 [shape = 's32[]', space=sflag, size = 0x4, offset = 0, fixed_abs, tag = 'sflag constant byte address 0x0 - dummy sync flag']
  #allocation6 [shape = 'u32[]', space=smem, size = 0x4, offset = 0x44, fixed_abs, tag = 'smem constant byte address 0x44 - assertion arg 0']
  #allocation7 [shape = 'u32[]', space=smem, size = 0x4, offset = 0x48, fixed_abs, tag = 'smem constant byte address 0x48 - assertion arg 1']
  %s0 = inlined_call_operand.vmem [shape: bf16[36,384], index: 0, kind: input, shape index: {}]
  %s1 = inlined_call_operand.vmem [shape: bf16[8,36], index: 1, kind: input, shape index: {}]
  %s2 = inlined_call_operand.vmem [shape: f32[8,1], index: 2, kind: input, shape index: {}]
  %s3 = inlined_call_operand.vmem [shape: bf16[16,72], index: 3, kind: input, shape index: {}]
  %s4 = inlined_call_operand.vmem [shape: f32[16,1], index: 4, kind: input, shape index: {}]
  %s5 = inlined_call_operand.hbm [shape: bf16[16,256,128], index: 5, kind: input, shape index: {}]
  %s6 = inlined_call_operand.vmem [shape: bf16[128,128], index: 6, kind: input, shape index: {}]
  %s7 = inlined_call_operand.vmem [shape: bf16[128,128], index: 7, kind: input, shape index: {}]
  %s8 = inlined_call_operand.vmem [shape: f32[1,128], index: 8, kind: output, shape index: {}]
  %s9 = sld [smem:[#allocation0]]
  $region42: #{deep_q_forward.1} parent=0
    _
  %s11 = ssub.s32 1, %s9
  %s12 = scalar_select 0, %s11, %s9
  // Predicated region
  $region2: #{deep_q_forward.1} parent=0 // pred_check
    _
  $region3: #{deep_q_forward.1} parent=0 // pred_check_branch
    %14 = sbr.rel (0) target = $region5
  $region4: #{deep_q_forward.1} parent=0 // pred_region
    _
  $region5: #{deep_q_forward.1} parent=0 // pred_fallthru
    _
  // Predicated region
  $region6: #{deep_q_forward.1} parent=0 // pred_check
    _
  $region7: #{deep_q_forward.1} parent=0 // pred_check_branch
    %16 = sbr.rel (0) target = $region9
  $region8: #{deep_q_forward.1} parent=0 // pred_region
    _
  $region9: #{deep_q_forward.1} parent=0 // pred_fallthru
    _
  // Predicated region
  $region10: #{deep_q_forward.1} parent=0 // pred_check
    _
  $region11: #{deep_q_forward.1} parent=0 // pred_check_branch
    %18 = sbr.rel (0) target = $region13
  $region12: #{deep_q_forward.1} parent=0 // pred_region
    _
  $region13: #{deep_q_forward.1} parent=0 // pred_fallthru
    _
  // Predicated region
  $region14: #{deep_q_forward.1} parent=0 // pred_check
    _
  $region15: #{deep_q_forward.1} parent=0 // pred_check_branch
    %20 = sbr.rel (0) target = $region17
  $region16: #{deep_q_forward.1} parent=0 // pred_region
    _
  $region17: #{deep_q_forward.1} parent=0 // pred_fallthru
    _
  // Predicated region
  $region18: #{deep_q_forward.1} parent=0 // pred_check
    _
  $region19: #{deep_q_forward.1} parent=0 // pred_check_branch
    %22 = sbr.rel (0) target = $region21
  $region20: #{deep_q_forward.1} parent=0 // pred_region
    _
  $region21: #{deep_q_forward.1} parent=0 // pred_fallthru
    _
  // Predicated region
  $region22: #{deep_q_forward.1} parent=0 // pred_check
    _
  $region23: #{deep_q_forward.1} parent=0 // pred_check_branch
    %24 = sbr.rel (0) target = $region25
  $region24: #{deep_q_forward.1} parent=0 // pred_region
    _
  $region25: #{deep_q_forward.1} parent=0 // pred_fallthru
    _
  // Predicated region
  $region26: #{deep_q_forward.1} parent=0 // pred_check
    _
  $region27: #{deep_q_forward.1} parent=0 // pred_check_branch
    %26 = sbr.rel (0) target = $region29
  $region28: #{deep_q_forward.1} parent=0 // pred_region
    _
  $region29: #{deep_q_forward.1} parent=0 // pred_fallthru
    _
  // Predicated region
  $region30: #{deep_q_forward.1} parent=0 // pred_check
    _
  $region31: #{deep_q_forward.1} parent=0 // pred_check_branch
    %29 = sbr.rel target = $region33
  $region32: #{deep_q_forward.1} parent=0 // pred_region
    %30 = sst [smem:[#allocation6]] [#allocation5]
    %31 = sst [smem:[#allocation7]] [#allocation4]
  $region33: #{deep_q_forward.1} parent=0 // pred_fallthru
    _
  %33 = shalt.err (0)
  %s35 = sshll.u32 [#allocation2], 4
  %s36 = int_to_ptr.vmem [resolvable:$true] %s35
  %38 = dma.hbm_to_vmem [thread:$0]  %s5, 32768, %s36, [#allocation3]
  %v39 = vld [vmem:[%s1] sm:$0xf]
  %v40 = vld [vmem:[%s0] sm:$0xff]
  %v41 = vld [vmem:[%s0 + $0x8] sm:$0xf]
  %v42 = vld [vmem:[%s0 + $0xc] sm:$0xff]
  %v43 = vld [vmem:[%s0 + $0x14] sm:$0xf]
  %v44 = vld [vmem:[%s0 + $0x18] sm:$0xff]
  %v45 = vld [vmem:[%s0 + $0x20] sm:$0xf]
  %v46 = vld [vmem:[%s0 + $0x24] sm:$0xff]
  %v47 = vld [vmem:[%s0 + $0x2c] sm:$0xf]
  %v48 = vld [vmem:[%s0 + $0x30] sm:$0x33]
  %v49 = vld [vmem:[%s0 + $0x38] sm:$0x3]
  %v50 = vld [vmem:[%s2] sm:$0xff]
  %52 = vset.pattern.permute.xlu0 0
  %53 = vperm.xlu0 %52, %v50
  %v54 = vpop.permute.xlu0 %53
  %v66 = vunpack.c.l.b16 %v40
  %v67 = vunpack.c.h.b16 %v40
  %v68 = vunpack.c.l.b16 %v41
  %v69 = vunpack.c.l.b16 %v42
  %v70 = vunpack.c.h.b16 %v42
  %v71 = vunpack.c.l.b16 %v43
  %v72 = vunpack.c.l.b16 %v44
  %v73 = vunpack.c.h.b16 %v44
  %v74 = vunpack.c.l.b16 %v45
  %v75 = vunpack.c.l.b16 %v46
  %v76 = vunpack.c.h.b16 %v46
  %v77 = vunpack.c.l.b16 %v47
  %v78 = vunpack.c.l.b16 %v48
  %v79 = vunpack.c.h.b16 %v48
  %v80 = vunpack.c.l.b16 %v49
  %v81 = vpack.c.b16 %v69, %v66
  %v82 = vpack.c.b16 %v70, %v67
  %v83 = vpack.c.b16 %v71, %v68
  %v84 = vpack.c.b16 %v75, %v72
  %v85 = vpack.c.b16 %v76, %v73
  %v86 = vpack.c.b16 %v77, %v74
  %v87 = vpack.c.b16 %v78, %v78
  %v88 = vpack.c.b16 %v79, %v79
  %v89 = vpack.c.b16 %v80, %v80
  %vm96 = vcmask 293888
  %v98 = vsel %vm96, %v39, 0
  %vm100 = vcmask 1041408
  %v102 = vsel %vm100, %v87, 0
  %v105 = vsel %vm100, %v88, 0
  %v108 = vsel %vm100, %v89, 0
  %110 = vmatprep.subr.bf16.mxu0 %v82
  %111 = vmatpush1.bf16.msra.mxu0 %v81
  %112 = vmatprep.subr.bf16.mxu0 %v85
  %113 = vmatpush1.bf16.msra.mxu0 %v84
  %114 = vmatprep.subr.bf16.mxu0 %v105
  %115 = vmatpush1.bf16.msra.mxu0 %v102
  %116 = vmatprep.subr.bf16.mxu0 0
  %117 = vmatpush1.bf16.msra.mxu0 0
  %118 = vmatprep.subr.bf16.mxu0 0
  %119 = vmatpush1.bf16.msra.mxu0 0
  %120 = vmatprep.subr.bf16.mxu0 0
  %121 = vmatpush1.bf16.msra.mxu0 0
  %122 = vmatprep.subr.bf16.mxu0 0
  %123 = vmatpush1.bf16.msra.mxu0 0
  %124 = vmatprep.subr.bf16.mxu0 0
  %125 = vmatpush1.bf16.msra.mxu0 0
  %126 = vmatprep.subr.bf16.mxu0 0
  %127 = vmatpush1.bf16.msra.mxu0 0
  %128 = vmatprep.subr.bf16.mxu0 0
  %129 = vmatpush1.bf16.msra.mxu0 0
  %130 = vmatprep.subr.bf16.mxu0 0
  %131 = vmatpush1.bf16.msra.mxu0 0
  %132 = vmatprep.subr.bf16.mxu0 0
  %133 = vmatpush1.bf16.msra.mxu0 0
  %134 = vmatprep.subr.bf16.mxu0 0
  %135 = vmatpush1.bf16.msra.mxu0 0
  %136 = vmatprep.subr.bf16.mxu0 0
  %137 = vmatpush1.bf16.msra.mxu0 0
  %138 = vmatprep.subr.bf16.mxu0 0
  %139 = vmatpush1.bf16.msra.mxu0 0
  %140 = vmatprep.subr.bf16.mxu0 0
  %141 = vmatpush1.bf16.msra.mxu0 0
  %142 = vmatprep.mubr.bf16.mxu0 0
  %143 = vmatmul.mubr.bf16.gmra.mrb[0].mxu0 %v98
  %v144 = vpop.f32.mrb[0].mxu0
  %v145 = vadd.f32 %v54, %v144
  %v146 = vpop.f32.mrb[0].mxu0
  %v147 = vadd.f32 %v54, %v146
  %v148 = vpop.f32.mrb[0].mxu0
  %v149 = vpop.f32.mrb[0].mxu0
  %150 = vdwg.mxu0
  %151 = vmatprep.subr.bf16.mxu0 0
  %152 = vmatpush1.bf16.msra.mxu0 %v83
  %153 = vmatprep.subr.bf16.mxu0 0
  %154 = vmatpush1.bf16.msra.mxu0 %v86
  %155 = vmatprep.subr.bf16.mxu0 0
  %156 = vmatpush1.bf16.msra.mxu0 %v108
  %157 = vmatprep.subr.bf16.mxu0 0
  %158 = vmatpush1.bf16.msra.mxu0 0
  %159 = vmatprep.subr.bf16.mxu0 0
  %160 = vmatpush1.bf16.msra.mxu0 0
  %161 = vmatprep.subr.bf16.mxu0 0
  %162 = vmatpush1.bf16.msra.mxu0 0
  %163 = vmatprep.subr.bf16.mxu0 0
  %164 = vmatpush1.bf16.msra.mxu0 0
  %165 = vmatprep.subr.bf16.mxu0 0
  %166 = vmatpush1.bf16.msra.mxu0 0
  %167 = vmatprep.subr.bf16.mxu0 0
  %168 = vmatpush1.bf16.msra.mxu0 0
  %169 = vmatprep.subr.bf16.mxu0 0
  %170 = vmatpush1.bf16.msra.mxu0 0
  %171 = vmatprep.subr.bf16.mxu0 0
  %172 = vmatpush1.bf16.msra.mxu0 0
  %173 = vmatprep.subr.bf16.mxu0 0
  %174 = vmatpush1.bf16.msra.mxu0 0
  %175 = vmatprep.subr.bf16.mxu0 0
  %176 = vmatpush1.bf16.msra.mxu0 0
  %177 = vmatprep.subr.bf16.mxu0 0
  %178 = vmatpush1.bf16.msra.mxu0 0
  %179 = vmatprep.subr.bf16.mxu0 0
  %180 = vmatpush1.bf16.msra.mxu0 0
  %181 = vmatprep.subr.bf16.mxu0 0
  %182 = vmatpush1.bf16.msra.mxu0 0
  %183 = vmatprep.mubr.bf16.mxu0 0
  %184 = vmatmul.mubr.bf16.gmra.mrb[0].mxu0 %v98
  %v185 = vpop.f32.mrb[0].mxu0
  %v186 = vadd.f32 %v54, %v185
  %v187 = vpop.f32.mrb[0].mxu0
  %v188 = vpop.f32.mrb[0].mxu0
  %v189 = vpop.f32.mrb[0].mxu0
  %190 = vdwg.mxu0
  %v191 = vmax.f32 %v145, 0.0
  %v192 = vmax.f32 %v147, 0.0
  %v193 = vmax.f32 %v186, 0.0
  %197 = vrot.lane.b32.xlu0 %v191, 127
  %v198 = vpop.permute.xlu0 %197
  %199 = vrot.lane.b32.xlu0 %v192, 127
  %v200 = vpop.permute.xlu0 %199
  %201 = vrot.lane.b32.xlu0 %v193, 127
  %v202 = vpop.permute.xlu0 %201
  %vm203 = vcmask 1039360
  %v204 = vsel %vm203, %v198, %v200
  %v205 = vsel %vm203, %v200, %v202
  %208 = vrot.lane.b32.xlu0 %v191, 126
  %v209 = vpop.permute.xlu0 %208
  %210 = vrot.lane.b32.xlu0 %v192, 126
  %v211 = vpop.permute.xlu0 %210
  %212 = vrot.lane.b32.xlu0 %v193, 126
  %v213 = vpop.permute.xlu0 %212
  %vm214 = vcmask 1031168
  %v215 = vsel %vm214, %v209, %v211
  %v216 = vsel %vm214, %v211, %v213
  %219 = vrot.lane.b32.xlu0 %v191, 112
  %v220 = vpop.permute.xlu0 %219
  %221 = vrot.lane.b32.xlu0 %v192, 112
  %v222 = vpop.permute.xlu0 %221
  %223 = vrot.lane.b32.xlu0 %v193, 112
  %v224 = vpop.permute.xlu0 %223
  %vm225 = vcmask 916480
  %v226 = vsel %vm225, %v220, %v222
  %v227 = vsel %vm225, %v222, %v224
  %230 = vrot.lane.b32.xlu0 %v191, 111
  %v231 = vpop.permute.xlu0 %230
  %232 = vrot.lane.b32.xlu0 %v192, 111
  %v233 = vpop.permute.xlu0 %232
  %234 = vrot.lane.b32.xlu0 %v193, 111
  %v235 = vpop.permute.xlu0 %234
  %vm236 = vcmask 908288
  %v237 = vsel %vm236, %v231, %v233
  %v238 = vsel %vm236, %v233, %v235
  %241 = vrot.lane.b32.xlu0 %v191, 110
  %v242 = vpop.permute.xlu0 %241
  %243 = vrot.lane.b32.xlu0 %v192, 110
  %v244 = vpop.permute.xlu0 %243
  %245 = vrot.lane.b32.xlu0 %v193, 110
  %v246 = vpop.permute.xlu0 %245
  %vm247 = vcmask 900096
  %v248 = vsel %vm247, %v242, %v244
  %v249 = vsel %vm247, %v244, %v246
  %252 = vrot.lane.b32.xlu0 %v191, 96
  %v253 = vpop.permute.xlu0 %252
  %254 = vrot.lane.b32.xlu0 %v192, 96
  %v255 = vpop.permute.xlu0 %254
  %256 = vrot.lane.b32.xlu0 %v193, 96
  %v257 = vpop.permute.xlu0 %256
  %vm258 = vcmask 785408
  %v259 = vsel %vm258, %v253, %v255
  %v260 = vsel %vm258, %v255, %v257
  %263 = vrot.lane.b32.xlu0 %v191, 95
  %v264 = vpop.permute.xlu0 %263
  %265 = vrot.lane.b32.xlu0 %v192, 95
  %v266 = vpop.permute.xlu0 %265
  %267 = vrot.lane.b32.xlu0 %v193, 95
  %v268 = vpop.permute.xlu0 %267
  %vm269 = vcmask 777216
  %v270 = vsel %vm269, %v264, %v266
  %v271 = vsel %vm269, %v266, %v268
  %274 = vrot.lane.b32.xlu0 %v191, 94
  %v275 = vpop.permute.xlu0 %274
  %276 = vrot.lane.b32.xlu0 %v192, 94
  %v277 = vpop.permute.xlu0 %276
  %278 = vrot.lane.b32.xlu0 %v193, 94
  %v279 = vpop.permute.xlu0 %278
  %vm280 = vcmask 769024
  %v281 = vsel %vm280, %v275, %v277
  %v282 = vsel %vm280, %v277, %v279
  %v285 = vld [vmem:[%s3] sm:$0xf]
  %v286 = vld [vmem:[%s3 + $0x4] sm:$0xf]
  %v287 = vpack.c.bf16 %v204, %v191
  %v288 = vpack.c.bf16 %v205, %v192
  %v289 = vpack.c.bf16 %v226, %v215
  %v290 = vpack.c.bf16 %v227, %v216
  %v291 = vpack.c.bf16 %v248, %v237
  %v292 = vpack.c.bf16 %v249, %v238
  %v293 = vpack.c.bf16 %v270, %v259
  %v294 = vpack.c.bf16 %v271, %v260
  %v295 = vpack.c.bf16 %v281, %v281
  %v296 = vpack.c.bf16 %v282, %v282
  %v297 = vld [vmem:[%s4] sm:$0xff]
  %v298 = vld [vmem:[%s4 + $0x8] sm:$0xff]
  %300 = vset.pattern.permute.xlu0 0
  %301 = vperm.xlu0 %300, %v297
  %v302 = vpop.permute.xlu0 %301
  %305 = vset.pattern.permute.xlu0 0
  %306 = vperm.xlu0 %305, %v298
  %v307 = vpop.permute.xlu0 %306
  %v311 = vunpack.c.l.b16 %v285
  %v312 = vunpack.c.l.b16 %v286
  %v313 = vpack.c.b16 %v312, %v311
  %vm314 = vcmask 588800
  %v316 = vsel %vm314, %v313, 0
  %vm318 = vcmask 1043456
  %v320 = vsel %vm318, %v295, 0
  %v323 = vsel %vm318, %v296, 0
  %325 = vmatprep.subr.bf16.mxu0 %v288
  %326 = vmatpush1.bf16.msra.mxu0 %v287
  %327 = vmatprep.subr.bf16.mxu0 %v290
  %328 = vmatpush1.bf16.msra.mxu0 %v289
  %329 = vmatprep.subr.bf16.mxu0 %v292
  %330 = vmatpush1.bf16.msra.mxu0 %v291
  %331 = vmatprep.subr.bf16.mxu0 %v294
  %332 = vmatpush1.bf16.msra.mxu0 %v293
  %333 = vmatprep.subr.bf16.mxu0 %v323
  %334 = vmatpush1.bf16.msra.mxu0 %v320
  %335 = vmatprep.subr.bf16.mxu0 0
  %336 = vmatpush1.bf16.msra.mxu0 0
  %337 = vmatprep.subr.bf16.mxu0 0
  %338 = vmatpush1.bf16.msra.mxu0 0
  %339 = vmatprep.subr.bf16.mxu0 0
  %340 = vmatpush1.bf16.msra.mxu0 0
  %341 = vmatprep.subr.bf16.mxu0 0
  %342 = vmatpush1.bf16.msra.mxu0 0
  %343 = vmatprep.subr.bf16.mxu0 0
  %344 = vmatpush1.bf16.msra.mxu0 0
  %345 = vmatprep.subr.bf16.mxu0 0
  %346 = vmatpush1.bf16.msra.mxu0 0
  %347 = vmatprep.subr.bf16.mxu0 0
  %348 = vmatpush1.bf16.msra.mxu0 0
  %349 = vmatprep.subr.bf16.mxu0 0
  %350 = vmatpush1.bf16.msra.mxu0 0
  %351 = vmatprep.subr.bf16.mxu0 0
  %352 = vmatpush1.bf16.msra.mxu0 0
  %353 = vmatprep.subr.bf16.mxu0 0
  %354 = vmatpush1.bf16.msra.mxu0 0
  %355 = vmatprep.subr.bf16.mxu0 0
  %356 = vmatpush1.bf16.msra.mxu0 0
  %357 = vmatprep.mubr.bf16.mxu0 0
  %358 = vmatmul.mubr.bf16.gmra.mrb[0].mxu0 %v316
  %v359 = vpop.f32.mrb[0].mxu0
  %v360 = vadd.f32 %v302, %v359
  %v361 = vpop.f32.mrb[0].mxu0
  %v362 = vadd.f32 %v302, %v361
  %v363 = vpop.f32.mrb[0].mxu0
  %v364 = vadd.f32 %v307, %v363
  %v365 = vpop.f32.mrb[0].mxu0
  %v366 = vadd.f32 %v307, %v365
  %367 = vdwg.mxu0
  %v368 = vmax.f32 %v360, 0.0
  %v369 = vmax.f32 %v362, 0.0
  %v370 = vmax.f32 %v364, 0.0
  %v371 = vmax.f32 %v366, 0.0
  %s372 = smul.u32 4, 16
  %s373 = smul.u32 %s372, 32
  %s374 = smul.u32 %s373, 1
  %s375 = sshll.u32 %s374, 4
  %376 = dma.done [#allocation3], %s375
  %v381 = vcombine.low %v368, %v369
  %v382 = vcombine.high %v368, %v369
  %v384 = vunpack.c.l.s4 1966171168
  %v385 = vunpack.c.0.s8 %v384
  %v386 = vlaneseq
  %v387 = vshrl.u32 %v386, 7
  %v388 = vsub.s32 %v385, %v387
  %v389 = vrot.slane %v381, %v388
  %v391 = vunpack.c.l.s4 1966171168
  %v392 = vunpack.c.0.s8 %v391
  %v393 = vlaneseq
  %v394 = vshrl.u32 %v393, 7
  %v395 = vsub.s32 %v392, %v394
  %v396 = vrot.slane %v382, %v395
  %v397 = vcombine.high %v389, %v389
  %v398 = vcombine.high %v396, %v396
  %v400 = vunpack.c.l.s4 1966171168
  %v401 = vunpack.c.0.s8 %v400
  %v402 = vlaneseq
  %v403 = vshrl.u32 %v402, 7
  %v404 = vsub.s32 %v401, %v403
  %v405 = vrot.slane %v389, %v404
  %v407 = vunpack.c.l.s4 1966171168
  %v408 = vunpack.c.0.s8 %v407
  %v409 = vlaneseq
  %v410 = vshrl.u32 %v409, 7
  %v411 = vsub.s32 %v408, %v410
  %v412 = vrot.slane %v396, %v411
  %v414 = vunpack.c.l.s4 1966171168
  %v415 = vunpack.c.0.s8 %v414
  %v416 = vlaneseq
  %v417 = vshrl.u32 %v416, 7
  %v418 = vsub.s32 %v415, %v417
  %v419 = vrot.slane %v397, %v418
  %v421 = vunpack.c.l.s4 1966171168
  %v422 = vunpack.c.0.s8 %v421
  %v423 = vlaneseq
  %v424 = vshrl.u32 %v423, 7
  %v425 = vsub.s32 %v422, %v424
  %v426 = vrot.slane %v398, %v425
  %v427 = vcombine.high %v405, %v405
  %v428 = vcombine.high %v412, %v412
  %v429 = vcombine.high %v419, %v419
  %v430 = vcombine.high %v426, %v426
  %v431 = vcombine.low %v370, %v371
  %v432 = vcombine.high %v370, %v371
  %v434 = vunpack.c.l.s4 1966171168
  %v435 = vunpack.c.0.s8 %v434
  %v436 = vlaneseq
  %v437 = vshrl.u32 %v436, 7
  %v438 = vsub.s32 %v435, %v437
  %v439 = vrot.slane %v431, %v438
  %v441 = vunpack.c.l.s4 1966171168
  %v442 = vunpack.c.0.s8 %v441
  %v443 = vlaneseq
  %v444 = vshrl.u32 %v443, 7
  %v445 = vsub.s32 %v442, %v444
  %v446 = vrot.slane %v432, %v445
  %v447 = vcombine.high %v439, %v439
  %v448 = vcombine.high %v446, %v446
  %v450 = vunpack.c.l.s4 1966171168
  %v451 = vunpack.c.0.s8 %v450
  %v452 = vlaneseq
  %v453 = vshrl.u32 %v452, 7
  %v454 = vsub.s32 %v451, %v453
  %v455 = vrot.slane %v439, %v454
  %v457 = vunpack.c.l.s4 1966171168
  %v458 = vunpack.c.0.s8 %v457
  %v459 = vlaneseq
  %v460 = vshrl.u32 %v459, 7
  %v461 = vsub.s32 %v458, %v460
  %v462 = vrot.slane %v446, %v461
  %v464 = vunpack.c.l.s4 1966171168
  %v465 = vunpack.c.0.s8 %v464
  %v466 = vlaneseq
  %v467 = vshrl.u32 %v466, 7
  %v468 = vsub.s32 %v465, %v467
  %v469 = vrot.slane %v447, %v468
  %v471 = vunpack.c.l.s4 1966171168
  %v472 = vunpack.c.0.s8 %v471
  %v473 = vlaneseq
  %v474 = vshrl.u32 %v473, 7
  %v475 = vsub.s32 %v472, %v474
  %v476 = vrot.slane %v448, %v475
  %v477 = vcombine.high %v455, %v455
  %v478 = vcombine.high %v462, %v462
  %v479 = vcombine.high %v469, %v469
  %v480 = vcombine.high %v476, %v476
  %v481 = vlaneseq
  %v482 = vshrl.u32 %v481, 7
  %v483 = vsub.s32 0, %v482
  %v484 = vrot.slane %v405, %v483
  %v485 = vlaneseq
  %v486 = vshrl.u32 %v485, 7
  %v487 = vsub.s32 1, %v486
  %v488 = vrot.slane %v405, %v487
  %v489 = vlaneseq
  %v490 = vshrl.u32 %v489, 7
  %v491 = vsub.s32 0, %v490
  %v492 = vrot.slane %v419, %v491
  %v493 = vlaneseq
  %v494 = vshrl.u32 %v493, 7
  %v495 = vsub.s32 1, %v494
  %v496 = vrot.slane %v419, %v495
  %v497 = vlaneseq
  %v498 = vshrl.u32 %v497, 7
  %v499 = vsub.s32 0, %v498
  %v500 = vrot.slane %v427, %v499
  %v501 = vlaneseq
  %v502 = vshrl.u32 %v501, 7
  %v503 = vsub.s32 1, %v502
  %v504 = vrot.slane %v427, %v503
  %v505 = vlaneseq
  %v506 = vshrl.u32 %v505, 7
  %v507 = vsub.s32 0, %v506
  %v508 = vrot.slane %v429, %v507
  %v509 = vlaneseq
  %v510 = vshrl.u32 %v509, 7
  %v511 = vsub.s32 1, %v510
  %v512 = vrot.slane %v429, %v511
  %v513 = vlaneseq
  %v514 = vshrl.u32 %v513, 7
  %v515 = vsub.s32 0, %v514
  %v516 = vrot.slane %v412, %v515
  %v517 = vlaneseq
  %v518 = vshrl.u32 %v517, 7
  %v519 = vsub.s32 1, %v518
  %v520 = vrot.slane %v412, %v519
  %v521 = vlaneseq
  %v522 = vshrl.u32 %v521, 7
  %v523 = vsub.s32 0, %v522
  %v524 = vrot.slane %v426, %v523
  %v525 = vlaneseq
  %v526 = vshrl.u32 %v525, 7
  %v527 = vsub.s32 1, %v526
  %v528 = vrot.slane %v426, %v527
  %v529 = vlaneseq
  %v530 = vshrl.u32 %v529, 7
  %v531 = vsub.s32 0, %v530
  %v532 = vrot.slane %v428, %v531
  %v533 = vlaneseq
  %v534 = vshrl.u32 %v533, 7
  %v535 = vsub.s32 1, %v534
  %v536 = vrot.slane %v428, %v535
  %v537 = vlaneseq
  %v538 = vshrl.u32 %v537, 7
  %v539 = vsub.s32 0, %v538
  %v540 = vrot.slane %v430, %v539
  %v541 = vlaneseq
  %v542 = vshrl.u32 %v541, 7
  %v543 = vsub.s32 1, %v542
  %v544 = vrot.slane %v430, %v543
  %v545 = vlaneseq
  %v546 = vshrl.u32 %v545, 7
  %v547 = vsub.s32 0, %v546
  %v548 = vrot.slane %v455, %v547
  %v549 = vlaneseq
  %v550 = vshrl.u32 %v549, 7
  %v551 = vsub.s32 1, %v550
  %v552 = vrot.slane %v455, %v551
  %v553 = vlaneseq
  %v554 = vshrl.u32 %v553, 7
  %v555 = vsub.s32 0, %v554
  %v556 = vrot.slane %v469, %v555
  %v557 = vlaneseq
  %v558 = vshrl.u32 %v557, 7
  %v559 = vsub.s32 1, %v558
  %v560 = vrot.slane %v469, %v559
  %v561 = vlaneseq
  %v562 = vshrl.u32 %v561, 7
  %v563 = vsub.s32 0, %v562
  %v564 = vrot.slane %v477, %v563
  %v565 = vlaneseq
  %v566 = vshrl.u32 %v565, 7
  %v567 = vsub.s32 1, %v566
  %v568 = vrot.slane %v477, %v567
  %v569 = vlaneseq
  %v570 = vshrl.u32 %v569, 7
  %v571 = vsub.s32 0, %v570
  %v572 = vrot.slane %v479, %v571
  %v573 = vlaneseq
  %v574 = vshrl.u32 %v573, 7
  %v575 = vsub.s32 1, %v574
  %v576 = vrot.slane %v479, %v575
  %v577 = vlaneseq
  %v578 = vshrl.u32 %v577, 7
  %v579 = vsub.s32 0, %v578
  %v580 = vrot.slane %v462, %v579
  %v581 = vlaneseq
  %v582 = vshrl.u32 %v581, 7
  %v583 = vsub.s32 1, %v582
  %v584 = vrot.slane %v462, %v583
  %v585 = vlaneseq
  %v586 = vshrl.u32 %v585, 7
  %v587 = vsub.s32 0, %v586
  %v588 = vrot.slane %v476, %v587
  %v589 = vlaneseq
  %v590 = vshrl.u32 %v589, 7
  %v591 = vsub.s32 1, %v590
  %v592 = vrot.slane %v476, %v591
  %v593 = vlaneseq
  %v594 = vshrl.u32 %v593, 7
  %v595 = vsub.s32 0, %v594
  %v596 = vrot.slane %v478, %v595
  %v597 = vlaneseq
  %v598 = vshrl.u32 %v597, 7
  %v599 = vsub.s32 1, %v598
  %v600 = vrot.slane %v478, %v599
  %v601 = vlaneseq
  %v602 = vshrl.u32 %v601, 7
  %v603 = vsub.s32 0, %v602
  %v604 = vrot.slane %v480, %v603
  %v605 = vlaneseq
  %v606 = vshrl.u32 %v605, 7
  %v607 = vsub.s32 1, %v606
  %v608 = vrot.slane %v480, %v607
  %v641 = vpack.c.bf16 %v484, %v484
  %v642 = vpack.c.bf16 %v488, %v488
  %v643 = vpack.c.bf16 %v492, %v492
  %v644 = vpack.c.bf16 %v496, %v496
  %v645 = vpack.c.bf16 %v500, %v500
  %v646 = vpack.c.bf16 %v504, %v504
  %v647 = vpack.c.bf16 %v508, %v508
  %v648 = vpack.c.bf16 %v512, %v512
  %v649 = vpack.c.bf16 %v516, %v516
  %v650 = vpack.c.bf16 %v520, %v520
  %v651 = vpack.c.bf16 %v524, %v524
  %v652 = vpack.c.bf16 %v528, %v528
  %v653 = vpack.c.bf16 %v532, %v532
  %v654 = vpack.c.bf16 %v536, %v536
  %v655 = vpack.c.bf16 %v540, %v540
  %v656 = vpack.c.bf16 %v544, %v544
  %v657 = vpack.c.bf16 %v548, %v548
  %v658 = vpack.c.bf16 %v552, %v552
  %v659 = vpack.c.bf16 %v556, %v556
  %v660 = vpack.c.bf16 %v560, %v560
  %v661 = vpack.c.bf16 %v564, %v564
  %v662 = vpack.c.bf16 %v568, %v568
  %v663 = vpack.c.bf16 %v572, %v572
  %v664 = vpack.c.bf16 %v576, %v576
  %v665 = vpack.c.bf16 %v580, %v580
  %v666 = vpack.c.bf16 %v584, %v584
  %v667 = vpack.c.bf16 %v588, %v588
  %v668 = vpack.c.bf16 %v592, %v592
  %v669 = vpack.c.bf16 %v596, %v596
  %v670 = vpack.c.bf16 %v600, %v600
  %v671 = vpack.c.bf16 %v604, %v604
  %v672 = vpack.c.bf16 %v608, %v608
  %v673 = vld [vmem:[#allocation2] sm:$0xff]
  %v674 = vld [vmem:[#allocation2 + $0x8] sm:$0xff]
  %v675 = vld [vmem:[#allocation2 + $0x10] sm:$0xff]
  %v676 = vld [vmem:[#allocation2 + $0x18] sm:$0xff]
  %v677 = vld [vmem:[#allocation2 + $0x20] sm:$0xff]
  %v678 = vld [vmem:[#allocation2 + $0x28] sm:$0xff]
  %v679 = vld [vmem:[#allocation2 + $0x30] sm:$0xff]
  %v680 = vld [vmem:[#allocation2 + $0x38] sm:$0xff]
  %v681 = vld [vmem:[#allocation2 + $0x40] sm:$0xff]
  %v682 = vld [vmem:[#allocation2 + $0x48] sm:$0xff]
  %v683 = vld [vmem:[#allocation2 + $0x50] sm:$0xff]
  %v684 = vld [vmem:[#allocation2 + $0x58] sm:$0xff]
  %v685 = vld [vmem:[#allocation2 + $0x60] sm:$0xff]
  %v686 = vld [vmem:[#allocation2 + $0x68] sm:$0xff]
  %v687 = vld [vmem:[#allocation2 + $0x70] sm:$0xff]
  %v688 = vld [vmem:[#allocation2 + $0x78] sm:$0xff]
  %v689 = vld [vmem:[#allocation2 + $0x80] sm:$0xff]
  %v690 = vld [vmem:[#allocation2 + $0x88] sm:$0xff]
  %v691 = vld [vmem:[#allocation2 + $0x90] sm:$0xff]
  %v692 = vld [vmem:[#allocation2 + $0x98] sm:$0xff]
  %v693 = vld [vmem:[#allocation2 + $0xa0] sm:$0xff]
  %v694 = vld [vmem:[#allocation2 + $0xa8] sm:$0xff]
  %v695 = vld [vmem:[#allocation2 + $0xb0] sm:$0xff]
  %v696 = vld [vmem:[#allocation2 + $0xb8] sm:$0xff]
  %v697 = vld [vmem:[#allocation2 + $0xc0] sm:$0xff]
  %v698 = vld [vmem:[#allocation2 + $0xc8] sm:$0xff]
  %v699 = vld [vmem:[#allocation2 + $0xd0] sm:$0xff]
  %v700 = vld [vmem:[#allocation2 + $0xd8] sm:$0xff]
  %v701 = vld [vmem:[#allocation2 + $0xe0] sm:$0xff]
  %v702 = vld [vmem:[#allocation2 + $0xe8] sm:$0xff]
  %v703 = vld [vmem:[#allocation2 + $0xf0] sm:$0xff]
  %v704 = vld [vmem:[#allocation2 + $0xf8] sm:$0xff]
  %v705 = vld [vmem:[#allocation2 + $0x100] sm:$0xff]
  %v706 = vld [vmem:[#allocation2 + $0x108] sm:$0xff]
  %v707 = vld [vmem:[#allocation2 + $0x110] sm:$0xff]
  %v708 = vld [vmem:[#allocation2 + $0x118] sm:$0xff]
  %v709 = vld [vmem:[#allocation2 + $0x120] sm:$0xff]
  %v710 = vld [vmem:[#allocation2 + $0x128] sm:$0xff]
  %v711 = vld [vmem:[#allocation2 + $0x130] sm:$0xff]
  %v712 = vld [vmem:[#allocation2 + $0x138] sm:$0xff]
  %v713 = vld [vmem:[#allocation2 + $0x140] sm:$0xff]
  %v714 = vld [vmem:[#allocation2 + $0x148] sm:$0xff]
  %v715 = vld [vmem:[#allocation2 + $0x150] sm:$0xff]
  %v716 = vld [vmem:[#allocation2 + $0x158] sm:$0xff]
  %v717 = vld [vmem:[#allocation2 + $0x160] sm:$0xff]
  %v718 = vld [vmem:[#allocation2 + $0x168] sm:$0xff]
  %v719 = vld [vmem:[#allocation2 + $0x170] sm:$0xff]
  %v720 = vld [vmem:[#allocation2 + $0x178] sm:$0xff]
  %v721 = vld [vmem:[#allocation2 + $0x180] sm:$0xff]
  %v722 = vld [vmem:[#allocation2 + $0x188] sm:$0xff]
  %v723 = vld [vmem:[#allocation2 + $0x190] sm:$0xff]
  %v724 = vld [vmem:[#allocation2 + $0x198] sm:$0xff]
  %v725 = vld [vmem:[#allocation2 + $0x1a0] sm:$0xff]
  %v726 = vld [vmem:[#allocation2 + $0x1a8] sm:$0xff]
  %v727 = vld [vmem:[#allocation2 + $0x1b0] sm:$0xff]
  %v728 = vld [vmem:[#allocation2 + $0x1b8] sm:$0xff]
  %v729 = vld [vmem:[#allocation2 + $0x1c0] sm:$0xff]
  %v730 = vld [vmem:[#allocation2 + $0x1c8] sm:$0xff]
  %v731 = vld [vmem:[#allocation2 + $0x1d0] sm:$0xff]
  %v732 = vld [vmem:[#allocation2 + $0x1d8] sm:$0xff]
  %v733 = vld [vmem:[#allocation2 + $0x1e0] sm:$0xff]
  %v734 = vld [vmem:[#allocation2 + $0x1e8] sm:$0xff]
  %v735 = vld [vmem:[#allocation2 + $0x1f0] sm:$0xff]
  %v736 = vld [vmem:[#allocation2 + $0x1f8] sm:$0xff]
  %v737 = vld [vmem:[#allocation2 + $0x200] sm:$0xff]
  %v738 = vld [vmem:[#allocation2 + $0x208] sm:$0xff]
  %v739 = vld [vmem:[#allocation2 + $0x210] sm:$0xff]
  %v740 = vld [vmem:[#allocation2 + $0x218] sm:$0xff]
  %v741 = vld [vmem:[#allocation2 + $0x220] sm:$0xff]
  %v742 = vld [vmem:[#allocation2 + $0x228] sm:$0xff]
  %v743 = vld [vmem:[#allocation2 + $0x230] sm:$0xff]
  %v744 = vld [vmem:[#allocation2 + $0x238] sm:$0xff]
  %v745 = vld [vmem:[#allocation2 + $0x240] sm:$0xff]
  %v746 = vld [vmem:[#allocation2 + $0x248] sm:$0xff]
  %v747 = vld [vmem:[#allocation2 + $0x250] sm:$0xff]
  %v748 = vld [vmem:[#allocation2 + $0x258] sm:$0xff]
  %v749 = vld [vmem:[#allocation2 + $0x260] sm:$0xff]
  %v750 = vld [vmem:[#allocation2 + $0x268] sm:$0xff]
  %v751 = vld [vmem:[#allocation2 + $0x270] sm:$0xff]
  %v752 = vld [vmem:[#allocation2 + $0x278] sm:$0xff]
  %v753 = vld [vmem:[#allocation2 + $0x280] sm:$0xff]
  %v754 = vld [vmem:[#allocation2 + $0x288] sm:$0xff]
  %v755 = vld [vmem:[#allocation2 + $0x290] sm:$0xff]
  %v756 = vld [vmem:[#allocation2 + $0x298] sm:$0xff]
  %v757 = vld [vmem:[#allocation2 + $0x2a0] sm:$0xff]
  %v758 = vld [vmem:[#allocation2 + $0x2a8] sm:$0xff]
  %v759 = vld [vmem:[#allocation2 + $0x2b0] sm:$0xff]
  %v760 = vld [vmem:[#allocation2 + $0x2b8] sm:$0xff]
  %v761 = vld [vmem:[#allocation2 + $0x2c0] sm:$0xff]
  %v762 = vld [vmem:[#allocation2 + $0x2c8] sm:$0xff]
  %v763 = vld [vmem:[#allocation2 + $0x2d0] sm:$0xff]
  %v764 = vld [vmem:[#allocation2 + $0x2d8] sm:$0xff]
  %v765 = vld [vmem:[#allocation2 + $0x2e0] sm:$0xff]
  %v766 = vld [vmem:[#allocation2 + $0x2e8] sm:$0xff]
  %v767 = vld [vmem:[#allocation2 + $0x2f0] sm:$0xff]
  %v768 = vld [vmem:[#allocation2 + $0x2f8] sm:$0xff]
  %v769 = vld [vmem:[#allocation2 + $0x300] sm:$0xff]
  %v770 = vld [vmem:[#allocation2 + $0x308] sm:$0xff]
  %v771 = vld [vmem:[#allocation2 + $0x310] sm:$0xff]
  %v772 = vld [vmem:[#allocation2 + $0x318] sm:$0xff]
  %v773 = vld [vmem:[#allocation2 + $0x320] sm:$0xff]
  %v774 = vld [vmem:[#allocation2 + $0x328] sm:$0xff]
  %v775 = vld [vmem:[#allocation2 + $0x330] sm:$0xff]
  %v776 = vld [vmem:[#allocation2 + $0x338] sm:$0xff]
  %v777 = vld [vmem:[#allocation2 + $0x340] sm:$0xff]
  %v778 = vld [vmem:[#allocation2 + $0x348] sm:$0xff]
  %v779 = vld [vmem:[#allocation2 + $0x350] sm:$0xff]
  %v780 = vld [vmem:[#allocation2 + $0x358] sm:$0xff]
  %v781 = vld [vmem:[#allocation2 + $0x360] sm:$0xff]
  %v782 = vld [vmem:[#allocation2 + $0x368] sm:$0xff]
  %v783 = vld [vmem:[#allocation2 + $0x370] sm:$0xff]
  %v784 = vld [vmem:[#allocation2 + $0x378] sm:$0xff]
  %v785 = vld [vmem:[#allocation2 + $0x380] sm:$0xff]
  %v786 = vld [vmem:[#allocation2 + $0x388] sm:$0xff]
  %v787 = vld [vmem:[#allocation2 + $0x390] sm:$0xff]
  %v788 = vld [vmem:[#allocation2 + $0x398] sm:$0xff]
  %v789 = vld [vmem:[#allocation2 + $0x3a0] sm:$0xff]
  %v790 = vld [vmem:[#allocation2 + $0x3a8] sm:$0xff]
  %v791 = vld [vmem:[#allocation2 + $0x3b0] sm:$0xff]
  %v792 = vld [vmem:[#allocation2 + $0x3b8] sm:$0xff]
  %v793 = vld [vmem:[#allocation2 + $0x3c0] sm:$0xff]
  %v794 = vld [vmem:[#allocation2 + $0x3c8] sm:$0xff]
  %v795 = vld [vmem:[#allocation2 + $0x3d0] sm:$0xff]
  %v796 = vld [vmem:[#allocation2 + $0x3d8] sm:$0xff]
  %v797 = vld [vmem:[#allocation2 + $0x3e0] sm:$0xff]
  %v798 = vld [vmem:[#allocation2 + $0x3e8] sm:$0xff]
  %v799 = vld [vmem:[#allocation2 + $0x3f0] sm:$0xff]
  %v800 = vld [vmem:[#allocation2 + $0x3f8] sm:$0xff]
  %v801 = vld [vmem:[#allocation2 + $0x400] sm:$0xff]
  %v802 = vld [vmem:[#allocation2 + $0x408] sm:$0xff]
  %v803 = vld [vmem:[#allocation2 + $0x410] sm:$0xff]
  %v804 = vld [vmem:[#allocation2 + $0x418] sm:$0xff]
  %v805 = vld [vmem:[#allocation2 + $0x420] sm:$0xff]
  %v806 = vld [vmem:[#allocation2 + $0x428] sm:$0xff]
  %v807 = vld [vmem:[#allocation2 + $0x430] sm:$0xff]
  %v808 = vld [vmem:[#allocation2 + $0x438] sm:$0xff]
  %v809 = vld [vmem:[#allocation2 + $0x440] sm:$0xff]
  %v810 = vld [vmem:[#allocation2 + $0x448] sm:$0xff]
  %v811 = vld [vmem:[#allocation2 + $0x450] sm:$0xff]
  %v812 = vld [vmem:[#allocation2 + $0x458] sm:$0xff]
  %v813 = vld [vmem:[#allocation2 + $0x460] sm:$0xff]
  %v814 = vld [vmem:[#allocation2 + $0x468] sm:$0xff]
  %v815 = vld [vmem:[#allocation2 + $0x470] sm:$0xff]
  %v816 = vld [vmem:[#allocation2 + $0x478] sm:$0xff]
  %v817 = vld [vmem:[#allocation2 + $0x480] sm:$0xff]
  %v818 = vld [vmem:[#allocation2 + $0x488] sm:$0xff]
  %v819 = vld [vmem:[#allocation2 + $0x490] sm:$0xff]
  %v820 = vld [vmem:[#allocation2 + $0x498] sm:$0xff]
  %v821 = vld [vmem:[#allocation2 + $0x4a0] sm:$0xff]
  %v822 = vld [vmem:[#allocation2 + $0x4a8] sm:$0xff]
  %v823 = vld [vmem:[#allocation2 + $0x4b0] sm:$0xff]
  %v824 = vld [vmem:[#allocation2 + $0x4b8] sm:$0xff]
  %v825 = vld [vmem:[#allocation2 + $0x4c0] sm:$0xff]
  %v826 = vld [vmem:[#allocation2 + $0x4c8] sm:$0xff]
  %v827 = vld [vmem:[#allocation2 + $0x4d0] sm:$0xff]
  %v828 = vld [vmem:[#allocation2 + $0x4d8] sm:$0xff]
  %v829 = vld [vmem:[#allocation2 + $0x4e0] sm:$0xff]
  %v830 = vld [vmem:[#allocation2 + $0x4e8] sm:$0xff]
  %v831 = vld [vmem:[#allocation2 + $0x4f0] sm:$0xff]
  %v832 = vld [vmem:[#allocation2 + $0x4f8] sm:$0xff]
  %v833 = vld [vmem:[#allocation2 + $0x500] sm:$0xff]
  %v834 = vld [vmem:[#allocation2 + $0x508] sm:$0xff]
  %v835 = vld [vmem:[#allocation2 + $0x510] sm:$0xff]
  %v836 = vld [vmem:[#allocation2 + $0x518] sm:$0xff]
  %v837 = vld [vmem:[#allocation2 + $0x520] sm:$0xff]
  %v838 = vld [vmem:[#allocation2 + $0x528] sm:$0xff]
  %v839 = vld [vmem:[#allocation2 + $0x530] sm:$0xff]
  %v840 = vld [vmem:[#allocation2 + $0x538] sm:$0xff]
  %v841 = vld [vmem:[#allocation2 + $0x540] sm:$0xff]
  %v842 = vld [vmem:[#allocation2 + $0x548] sm:$0xff]
  %v843 = vld [vmem:[#allocation2 + $0x550] sm:$0xff]
  %v844 = vld [vmem:[#allocation2 + $0x558] sm:$0xff]
  %v845 = vld [vmem:[#allocation2 + $0x560] sm:$0xff]
  %v846 = vld [vmem:[#allocation2 + $0x568] sm:$0xff]
  %v847 = vld [vmem:[#allocation2 + $0x570] sm:$0xff]
  %v848 = vld [vmem:[#allocation2 + $0x578] sm:$0xff]
  %v849 = vld [vmem:[#allocation2 + $0x580] sm:$0xff]
  %v850 = vld [vmem:[#allocation2 + $0x588] sm:$0xff]
  %v851 = vld [vmem:[#allocation2 + $0x590] sm:$0xff]
  %v852 = vld [vmem:[#allocation2 + $0x598] sm:$0xff]
  %v853 = vld [vmem:[#allocation2 + $0x5a0] sm:$0xff]
  %v854 = vld [vmem:[#allocation2 + $0x5a8] sm:$0xff]
  %v855 = vld [vmem:[#allocation2 + $0x5b0] sm:$0xff]
  %v856 = vld [vmem:[#allocation2 + $0x5b8] sm:$0xff]
  %v857 = vld [vmem:[#allocation2 + $0x5c0] sm:$0xff]
  %v858 = vld [vmem:[#allocation2 + $0x5c8] sm:$0xff]
  %v859 = vld [vmem:[#allocation2 + $0x5d0] sm:$0xff]
  %v860 = vld [vmem:[#allocation2 + $0x5d8] sm:$0xff]
  %v861 = vld [vmem:[#allocation2 + $0x5e0] sm:$0xff]
  %v862 = vld [vmem:[#allocation2 + $0x5e8] sm:$0xff]
  %v863 = vld [vmem:[#allocation2 + $0x5f0] sm:$0xff]
  %v864 = vld [vmem:[#allocation2 + $0x5f8] sm:$0xff]
  %v865 = vld [vmem:[#allocation2 + $0x600] sm:$0xff]
  %v866 = vld [vmem:[#allocation2 + $0x608] sm:$0xff]
  %v867 = vld [vmem:[#allocation2 + $0x610] sm:$0xff]
  %v868 = vld [vmem:[#allocation2 + $0x618] sm:$0xff]
  %v869 = vld [vmem:[#allocation2 + $0x620] sm:$0xff]
  %v870 = vld [vmem:[#allocation2 + $0x628] sm:$0xff]
  %v871 = vld [vmem:[#allocation2 + $0x630] sm:$0xff]
  %v872 = vld [vmem:[#allocation2 + $0x638] sm:$0xff]
  %v873 = vld [vmem:[#allocation2 + $0x640] sm:$0xff]
  %v874 = vld [vmem:[#allocation2 + $0x648] sm:$0xff]
  %v875 = vld [vmem:[#allocation2 + $0x650] sm:$0xff]
  %v876 = vld [vmem:[#allocation2 + $0x658] sm:$0xff]
  %v877 = vld [vmem:[#allocation2 + $0x660] sm:$0xff]
  %v878 = vld [vmem:[#allocation2 + $0x668] sm:$0xff]
  %v879 = vld [vmem:[#allocation2 + $0x670] sm:$0xff]
  %v880 = vld [vmem:[#allocation2 + $0x678] sm:$0xff]
  %v881 = vld [vmem:[#allocation2 + $0x680] sm:$0xff]
  %v882 = vld [vmem:[#allocation2 + $0x688] sm:$0xff]
  %v883 = vld [vmem:[#allocation2 + $0x690] sm:$0xff]
  %v884 = vld [vmem:[#allocation2 + $0x698] sm:$0xff]
  %v885 = vld [vmem:[#allocation2 + $0x6a0] sm:$0xff]
  %v886 = vld [vmem:[#allocation2 + $0x6a8] sm:$0xff]
  %v887 = vld [vmem:[#allocation2 + $0x6b0] sm:$0xff]
  %v888 = vld [vmem:[#allocation2 + $0x6b8] sm:$0xff]
  %v889 = vld [vmem:[#allocation2 + $0x6c0] sm:$0xff]
  %v890 = vld [vmem:[#allocation2 + $0x6c8] sm:$0xff]
  %v891 = vld [vmem:[#allocation2 + $0x6d0] sm:$0xff]
  %v892 = vld [vmem:[#allocation2 + $0x6d8] sm:$0xff]
  %v893 = vld [vmem:[#allocation2 + $0x6e0] sm:$0xff]
  %v894 = vld [vmem:[#allocation2 + $0x6e8] sm:$0xff]
  %v895 = vld [vmem:[#allocation2 + $0x6f0] sm:$0xff]
  %v896 = vld [vmem:[#allocation2 + $0x6f8] sm:$0xff]
  %v897 = vld [vmem:[#allocation2 + $0x700] sm:$0xff]
  %v898 = vld [vmem:[#allocation2 + $0x708] sm:$0xff]
  %v899 = vld [vmem:[#allocation2 + $0x710] sm:$0xff]
  %v900 = vld [vmem:[#allocation2 + $0x718] sm:$0xff]
  %v901 = vld [vmem:[#allocation2 + $0x720] sm:$0xff]
  %v902 = vld [vmem:[#allocation2 + $0x728] sm:$0xff]
  %v903 = vld [vmem:[#allocation2 + $0x730] sm:$0xff]
  %v904 = vld [vmem:[#allocation2 + $0x738] sm:$0xff]
  %v905 = vld [vmem:[#allocation2 + $0x740] sm:$0xff]
  %v906 = vld [vmem:[#allocation2 + $0x748] sm:$0xff]
  %v907 = vld [vmem:[#allocation2 + $0x750] sm:$0xff]
  %v908 = vld [vmem:[#allocation2 + $0x758] sm:$0xff]
  %v909 = vld [vmem:[#allocation2 + $0x760] sm:$0xff]
  %v910 = vld [vmem:[#allocation2 + $0x768] sm:$0xff]
  %v911 = vld [vmem:[#allocation2 + $0x770] sm:$0xff]
  %v912 = vld [vmem:[#allocation2 + $0x778] sm:$0xff]
  %v913 = vld [vmem:[#allocation2 + $0x780] sm:$0xff]
  %v914 = vld [vmem:[#allocation2 + $0x788] sm:$0xff]
  %v915 = vld [vmem:[#allocation2 + $0x790] sm:$0xff]
  %v916 = vld [vmem:[#allocation2 + $0x798] sm:$0xff]
  %v917 = vld [vmem:[#allocation2 + $0x7a0] sm:$0xff]
  %v918 = vld [vmem:[#allocation2 + $0x7a8] sm:$0xff]
  %v919 = vld [vmem:[#allocation2 + $0x7b0] sm:$0xff]
  %v920 = vld [vmem:[#allocation2 + $0x7b8] sm:$0xff]
  %v921 = vld [vmem:[#allocation2 + $0x7c0] sm:$0xff]
  %v922 = vld [vmem:[#allocation2 + $0x7c8] sm:$0xff]
  %v923 = vld [vmem:[#allocation2 + $0x7d0] sm:$0xff]
  %v924 = vld [vmem:[#allocation2 + $0x7d8] sm:$0xff]
  %v925 = vld [vmem:[#allocation2 + $0x7e0] sm:$0xff]
  %v926 = vld [vmem:[#allocation2 + $0x7e8] sm:$0xff]
  %v927 = vld [vmem:[#allocation2 + $0x7f0] sm:$0xff]
  %v928 = vld [vmem:[#allocation2 + $0x7f8] sm:$0xff]
  %929 = vmatprep.subr.bf16.mxu0 0
  %930 = vmatpush1.bf16.msra.mxu0 %v673
  %931 = vmatprep.subr.bf16.mxu0 0
  %932 = vmatpush1.bf16.msra.mxu0 %v674
  %933 = vmatprep.subr.bf16.mxu0 0
  %934 = vmatpush1.bf16.msra.mxu0 %v675
  %935 = vmatprep.subr.bf16.mxu0 0
  %936 = vmatpush1.bf16.msra.mxu0 %v676
  %937 = vmatprep.subr.bf16.mxu0 0
  %938 = vmatpush1.bf16.msra.mxu0 %v677
  %939 = vmatprep.subr.bf16.mxu0 0
  %940 = vmatpush1.bf16.msra.mxu0 %v678
  %941 = vmatprep.subr.bf16.mxu0 0
  %942 = vmatpush1.bf16.msra.mxu0 %v679
  %943 = vmatprep.subr.bf16.mxu0 0
  %944 = vmatpush1.bf16.msra.mxu0 %v680
  %945 = vmatprep.subr.bf16.mxu0 0
  %946 = vmatpush1.bf16.msra.mxu0 %v681
  %947 = vmatprep.subr.bf16.mxu0 0
  %948 = vmatpush1.bf16.msra.mxu0 %v682
  %949 = vmatprep.subr.bf16.mxu0 0
  %950 = vmatpush1.bf16.msra.mxu0 %v683
  %951 = vmatprep.subr.bf16.mxu0 0
  %952 = vmatpush1.bf16.msra.mxu0 %v684
  %953 = vmatprep.subr.bf16.mxu0 0
  %954 = vmatpush1.bf16.msra.mxu0 %v685
  %955 = vmatprep.subr.bf16.mxu0 0
  %956 = vmatpush1.bf16.msra.mxu0 %v686
  %957 = vmatprep.subr.bf16.mxu0 0
  %958 = vmatpush1.bf16.msra.mxu0 %v687
  %959 = vmatprep.subr.bf16.mxu0 0
  %960 = vmatpush1.bf16.msra.mxu0 %v688
  %961 = vmatprep.mubr.bf16.mxu0 %v642
  %962 = vmatmul.mubr.bf16.gmra.mrb[0].mxu0 %v641
  %v963 = vpop.f32.mrb[0].mxu0
  %v964 = vadd.f32 0.0, %v963
  %v965 = vpop.f32.mrb[0].mxu0
  %v966 = vpop.f32.mrb[0].mxu0
  %v967 = vpop.f32.mrb[0].mxu0
  %968 = vdwg.mxu0
  %969 = vmatprep.subr.bf16.mxu0 0
  %970 = vmatpush1.bf16.msra.mxu0 %v689
  %971 = vmatprep.subr.bf16.mxu0 0
  %972 = vmatpush1.bf16.msra.mxu0 %v690
  %973 = vmatprep.subr.bf16.mxu0 0
  %974 = vmatpush1.bf16.msra.mxu0 %v691
  %975 = vmatprep.subr.bf16.mxu0 0
  %976 = vmatpush1.bf16.msra.mxu0 %v692
  %977 = vmatprep.subr.bf16.mxu0 0
  %978 = vmatpush1.bf16.msra.mxu0 %v693
  %979 = vmatprep.subr.bf16.mxu0 0
  %980 = vmatpush1.bf16.msra.mxu0 %v694
  %981 = vmatprep.subr.bf16.mxu0 0
  %982 = vmatpush1.bf16.msra.mxu0 %v695
  %983 = vmatprep.subr.bf16.mxu0 0
  %984 = vmatpush1.bf16.msra.mxu0 %v696
  %985 = vmatprep.subr.bf16.mxu0 0
  %986 = vmatpush1.bf16.msra.mxu0 %v697
  %987 = vmatprep.subr.bf16.mxu0 0
  %988 = vmatpush1.bf16.msra.mxu0 %v698
  %989 = vmatprep.subr.bf16.mxu0 0
  %990 = vmatpush1.bf16.msra.mxu0 %v699
  %991 = vmatprep.subr.bf16.mxu0 0
  %992 = vmatpush1.bf16.msra.mxu0 %v700
  %993 = vmatprep.subr.bf16.mxu0 0
  %994 = vmatpush1.bf16.msra.mxu0 %v701
  %995 = vmatprep.subr.bf16.mxu0 0
  %996 = vmatpush1.bf16.msra.mxu0 %v702
  %997 = vmatprep.subr.bf16.mxu0 0
  %998 = vmatpush1.bf16.msra.mxu0 %v703
  %999 = vmatprep.subr.bf16.mxu0 0
  %1000 = vmatpush1.bf16.msra.mxu0 %v704
  %1001 = vmatprep.mubr.bf16.mxu0 %v644
  %1002 = vmatmul.mubr.bf16.gmra.mrb[0].mxu0 %v643
  %v1003 = vpop.f32.mrb[0].mxu0
  %v1004 = vadd.f32 0.0, %v1003
  %v1005 = vpop.f32.mrb[0].mxu0
  %v1006 = vpop.f32.mrb[0].mxu0
  %v1007 = vpop.f32.mrb[0].mxu0
  %1008 = vdwg.mxu0
  %1009 = vmatprep.subr.bf16.mxu0 0
  %1010 = vmatpush1.bf16.msra.mxu0 %v705
  %1011 = vmatprep.subr.bf16.mxu0 0
  %1012 = vmatpush1.bf16.msra.mxu0 %v706
  %1013 = vmatprep.subr.bf16.mxu0 0
  %1014 = vmatpush1.bf16.msra.mxu0 %v707
  %1015 = vmatprep.subr.bf16.mxu0 0
  %1016 = vmatpush1.bf16.msra.mxu0 %v708
  %1017 = vmatprep.subr.bf16.mxu0 0
  %1018 = vmatpush1.bf16.msra.mxu0 %v709
  %1019 = vmatprep.subr.bf16.mxu0 0
  %1020 = vmatpush1.bf16.msra.mxu0 %v710
  %1021 = vmatprep.subr.bf16.mxu0 0
  %1022 = vmatpush1.bf16.msra.mxu0 %v711
  %1023 = vmatprep.subr.bf16.mxu0 0
  %1024 = vmatpush1.bf16.msra.mxu0 %v712
  %1025 = vmatprep.subr.bf16.mxu0 0
  %1026 = vmatpush1.bf16.msra.mxu0 %v713
  %1027 = vmatprep.subr.bf16.mxu0 0
  %1028 = vmatpush1.bf16.msra.mxu0 %v714
  %1029 = vmatprep.subr.bf16.mxu0 0
  %1030 = vmatpush1.bf16.msra.mxu0 %v715
  %1031 = vmatprep.subr.bf16.mxu0 0
  %1032 = vmatpush1.bf16.msra.mxu0 %v716
  %1033 = vmatprep.subr.bf16.mxu0 0
  %1034 = vmatpush1.bf16.msra.mxu0 %v717
  %1035 = vmatprep.subr.bf16.mxu0 0
  %1036 = vmatpush1.bf16.msra.mxu0 %v718
  %1037 = vmatprep.subr.bf16.mxu0 0
  %1038 = vmatpush1.bf16.msra.mxu0 %v719
  %1039 = vmatprep.subr.bf16.mxu0 0
  %1040 = vmatpush1.bf16.msra.mxu0 %v720
  %1041 = vmatprep.mubr.bf16.mxu0 %v646
  %1042 = vmatmul.mubr.bf16.gmra.mrb[0].mxu0 %v645
  %v1043 = vpop.f32.mrb[0].mxu0
  %v1044 = vadd.f32 0.0, %v1043
  %v1045 = vpop.f32.mrb[0].mxu0
  %v1046 = vpop.f32.mrb[0].mxu0
  %v1047 = vpop.f32.mrb[0].mxu0
  %1048 = vdwg.mxu0
  %1049 = vmatprep.subr.bf16.mxu0 0
  %1050 = vmatpush1.bf16.msra.mxu0 %v721
  %1051 = vmatprep.subr.bf16.mxu0 0
  %1052 = vmatpush1.bf16.msra.mxu0 %v722
  %1053 = vmatprep.subr.bf16.mxu0 0
  %1054 = vmatpush1.bf16.msra.mxu0 %v723
  %1055 = vmatprep.subr.bf16.mxu0 0
  %1056 = vmatpush1.bf16.msra.mxu0 %v724
  %1057 = vmatprep.subr.bf16.mxu0 0
  %1058 = vmatpush1.bf16.msra.mxu0 %v725
  %1059 = vmatprep.subr.bf16.mxu0 0
  %1060 = vmatpush1.bf16.msra.mxu0 %v726
  %1061 = vmatprep.subr.bf16.mxu0 0
  %1062 = vmatpush1.bf16.msra.mxu0 %v727
  %1063 = vmatprep.subr.bf16.mxu0 0
  %1064 = vmatpush1.bf16.msra.mxu0 %v728
  %1065 = vmatprep.subr.bf16.mxu0 0
  %1066 = vmatpush1.bf16.msra.mxu0 %v729
  %1067 = vmatprep.subr.bf16.mxu0 0
  %1068 = vmatpush1.bf16.msra.mxu0 %v730
  %1069 = vmatprep.subr.bf16.mxu0 0
  %1070 = vmatpush1.bf16.msra.mxu0 %v731
  %1071 = vmatprep.subr.bf16.mxu0 0
  %1072 = vmatpush1.bf16.msra.mxu0 %v732
  %1073 = vmatprep.subr.bf16.mxu0 0
  %1074 = vmatpush1.bf16.msra.mxu0 %v733
  %1075 = vmatprep.subr.bf16.mxu0 0
  %1076 = vmatpush1.bf16.msra.mxu0 %v734
  %1077 = vmatprep.subr.bf16.mxu0 0
  %1078 = vmatpush1.bf16.msra.mxu0 %v735
  %1079 = vmatprep.subr.bf16.mxu0 0
  %1080 = vmatpush1.bf16.msra.mxu0 %v736
  %1081 = vmatprep.mubr.bf16.mxu0 %v648
  %1082 = vmatmul.mubr.bf16.gmra.mrb[0].mxu0 %v647
  %v1083 = vpop.f32.mrb[0].mxu0
  %v1084 = vadd.f32 0.0, %v1083
  %v1085 = vpop.f32.mrb[0].mxu0
  %v1086 = vpop.f32.mrb[0].mxu0
  %v1087 = vpop.f32.mrb[0].mxu0
  %1088 = vdwg.mxu0
  %1089 = vmatprep.subr.bf16.mxu0 0
  %1090 = vmatpush1.bf16.msra.mxu0 %v737
  %1091 = vmatprep.subr.bf16.mxu0 0
  %1092 = vmatpush1.bf16.msra.mxu0 %v738
  %1093 = vmatprep.subr.bf16.mxu0 0
  %1094 = vmatpush1.bf16.msra.mxu0 %v739
  %1095 = vmatprep.subr.bf16.mxu0 0
  %1096 = vmatpush1.bf16.msra.mxu0 %v740
  %1097 = vmatprep.subr.bf16.mxu0 0
  %1098 = vmatpush1.bf16.msra.mxu0 %v741
  %1099 = vmatprep.subr.bf16.mxu0 0
  %1100 = vmatpush1.bf16.msra.mxu0 %v742
  %1101 = vmatprep.subr.bf16.mxu0 0
  %1102 = vmatpush1.bf16.msra.mxu0 %v743
  %1103 = vmatprep.subr.bf16.mxu0 0
  %1104 = vmatpush1.bf16.msra.mxu0 %v744
  %1105 = vmatprep.subr.bf16.mxu0 0
  %1106 = vmatpush1.bf16.msra.mxu0 %v745
  %1107 = vmatprep.subr.bf16.mxu0 0
  %1108 = vmatpush1.bf16.msra.mxu0 %v746
  %1109 = vmatprep.subr.bf16.mxu0 0
  %1110 = vmatpush1.bf16.msra.mxu0 %v747
  %1111 = vmatprep.subr.bf16.mxu0 0
  %1112 = vmatpush1.bf16.msra.mxu0 %v748
  %1113 = vmatprep.subr.bf16.mxu0 0
  %1114 = vmatpush1.bf16.msra.mxu0 %v749
  %1115 = vmatprep.subr.bf16.mxu0 0
  %1116 = vmatpush1.bf16.msra.mxu0 %v750
  %1117 = vmatprep.subr.bf16.mxu0 0
  %1118 = vmatpush1.bf16.msra.mxu0 %v751
  %1119 = vmatprep.subr.bf16.mxu0 0
  %1120 = vmatpush1.bf16.msra.mxu0 %v752
  %1121 = vmatprep.mubr.bf16.mxu0 %v650
  %1122 = vmatmul.mubr.bf16.gmra.mrb[0].mxu0 %v649
  %v1123 = vpop.f32.mrb[0].mxu0
  %v1124 = vadd.f32 0.0, %v1123
  %v1125 = vpop.f32.mrb[0].mxu0
  %v1126 = vpop.f32.mrb[0].mxu0
  %v1127 = vpop.f32.mrb[0].mxu0
  %1128 = vdwg.mxu0
  %1129 = vmatprep.subr.bf16.mxu0 0
  %1130 = vmatpush1.bf16.msra.mxu0 %v753
  %1131 = vmatprep.subr.bf16.mxu0 0
  %1132 = vmatpush1.bf16.msra.mxu0 %v754
  %1133 = vmatprep.subr.bf16.mxu0 0
  %1134 = vmatpush1.bf16.msra.mxu0 %v755
  %1135 = vmatprep.subr.bf16.mxu0 0
  %1136 = vmatpush1.bf16.msra.mxu0 %v756
  %1137 = vmatprep.subr.bf16.mxu0 0
  %1138 = vmatpush1.bf16.msra.mxu0 %v757
  %1139 = vmatprep.subr.bf16.mxu0 0
  %1140 = vmatpush1.bf16.msra.mxu0 %v758
  %1141 = vmatprep.subr.bf16.mxu0 0
  %1142 = vmatpush1.bf16.msra.mxu0 %v759
  %1143 = vmatprep.subr.bf16.mxu0 0
  %1144 = vmatpush1.bf16.msra.mxu0 %v760
  %1145 = vmatprep.subr.bf16.mxu0 0
  %1146 = vmatpush1.bf16.msra.mxu0 %v761
  %1147 = vmatprep.subr.bf16.mxu0 0
  %1148 = vmatpush1.bf16.msra.mxu0 %v762
  %1149 = vmatprep.subr.bf16.mxu0 0
  %1150 = vmatpush1.bf16.msra.mxu0 %v763
  %1151 = vmatprep.subr.bf16.mxu0 0
  %1152 = vmatpush1.bf16.msra.mxu0 %v764
  %1153 = vmatprep.subr.bf16.mxu0 0
  %1154 = vmatpush1.bf16.msra.mxu0 %v765
  %1155 = vmatprep.subr.bf16.mxu0 0
  %1156 = vmatpush1.bf16.msra.mxu0 %v766
  %1157 = vmatprep.subr.bf16.mxu0 0
  %1158 = vmatpush1.bf16.msra.mxu0 %v767
  %1159 = vmatprep.subr.bf16.mxu0 0
  %1160 = vmatpush1.bf16.msra.mxu0 %v768
  %1161 = vmatprep.mubr.bf16.mxu0 %v652
  %1162 = vmatmul.mubr.bf16.gmra.mrb[0].mxu0 %v651
  %v1163 = vpop.f32.mrb[0].mxu0
  %v1164 = vadd.f32 0.0, %v1163
  %v1165 = vpop.f32.mrb[0].mxu0
  %v1166 = vpop.f32.mrb[0].mxu0
  %v1167 = vpop.f32.mrb[0].mxu0
  %1168 = vdwg.mxu0
  %1169 = vmatprep.subr.bf16.mxu0 0
  %1170 = vmatpush1.bf16.msra.mxu0 %v769
  %1171 = vmatprep.subr.bf16.mxu0 0
  %1172 = vmatpush1.bf16.msra.mxu0 %v770
  %1173 = vmatprep.subr.bf16.mxu0 0
  %1174 = vmatpush1.bf16.msra.mxu0 %v771
  %1175 = vmatprep.subr.bf16.mxu0 0
  %1176 = vmatpush1.bf16.msra.mxu0 %v772
  %1177 = vmatprep.subr.bf16.mxu0 0
  %1178 = vmatpush1.bf16.msra.mxu0 %v773
  %1179 = vmatprep.subr.bf16.mxu0 0
  %1180 = vmatpush1.bf16.msra.mxu0 %v774
  %1181 = vmatprep.subr.bf16.mxu0 0
  %1182 = vmatpush1.bf16.msra.mxu0 %v775
  %1183 = vmatprep.subr.bf16.mxu0 0
  %1184 = vmatpush1.bf16.msra.mxu0 %v776
  %1185 = vmatprep.subr.bf16.mxu0 0
  %1186 = vmatpush1.bf16.msra.mxu0 %v777
  %1187 = vmatprep.subr.bf16.mxu0 0
  %1188 = vmatpush1.bf16.msra.mxu0 %v778
  %1189 = vmatprep.subr.bf16.mxu0 0
  %1190 = vmatpush1.bf16.msra.mxu0 %v779
  %1191 = vmatprep.subr.bf16.mxu0 0
  %1192 = vmatpush1.bf16.msra.mxu0 %v780
  %1193 = vmatprep.subr.bf16.mxu0 0
  %1194 = vmatpush1.bf16.msra.mxu0 %v781
  %1195 = vmatprep.subr.bf16.mxu0 0
  %1196 = vmatpush1.bf16.msra.mxu0 %v782
  %1197 = vmatprep.subr.bf16.mxu0 0
  %1198 = vmatpush1.bf16.msra.mxu0 %v783
  %1199 = vmatprep.subr.bf16.mxu0 0
  %1200 = vmatpush1.bf16.msra.mxu0 %v784
  %1201 = vmatprep.mubr.bf16.mxu0 %v654
  %1202 = vmatmul.mubr.bf16.gmra.mrb[0].mxu0 %v653
  %v1203 = vpop.f32.mrb[0].mxu0
  %v1204 = vadd.f32 0.0, %v1203
  %v1205 = vpop.f32.mrb[0].mxu0
  %v1206 = vpop.f32.mrb[0].mxu0
  %v1207 = vpop.f32.mrb[0].mxu0
  %1208 = vdwg.mxu0
  %1209 = vmatprep.subr.bf16.mxu0 0
  %1210 = vmatpush1.bf16.msra.mxu0 %v785
  %1211 = vmatprep.subr.bf16.mxu0 0
  %1212 = vmatpush1.bf16.msra.mxu0 %v786
  %1213 = vmatprep.subr.bf16.mxu0 0
  %1214 = vmatpush1.bf16.msra.mxu0 %v787
  %1215 = vmatprep.subr.bf16.mxu0 0
  %1216 = vmatpush1.bf16.msra.mxu0 %v788
  %1217 = vmatprep.subr.bf16.mxu0 0
  %1218 = vmatpush1.bf16.msra.mxu0 %v789
  %1219 = vmatprep.subr.bf16.mxu0 0
  %1220 = vmatpush1.bf16.msra.mxu0 %v790
  %1221 = vmatprep.subr.bf16.mxu0 0
  %1222 = vmatpush1.bf16.msra.mxu0 %v791
  %1223 = vmatprep.subr.bf16.mxu0 0
  %1224 = vmatpush1.bf16.msra.mxu0 %v792
  %1225 = vmatprep.subr.bf16.mxu0 0
  %1226 = vmatpush1.bf16.msra.mxu0 %v793
  %1227 = vmatprep.subr.bf16.mxu0 0
  %1228 = vmatpush1.bf16.msra.mxu0 %v794
  %1229 = vmatprep.subr.bf16.mxu0 0
  %1230 = vmatpush1.bf16.msra.mxu0 %v795
  %1231 = vmatprep.subr.bf16.mxu0 0
  %1232 = vmatpush1.bf16.msra.mxu0 %v796
  %1233 = vmatprep.subr.bf16.mxu0 0
  %1234 = vmatpush1.bf16.msra.mxu0 %v797
  %1235 = vmatprep.subr.bf16.mxu0 0
  %1236 = vmatpush1.bf16.msra.mxu0 %v798
  %1237 = vmatprep.subr.bf16.mxu0 0
  %1238 = vmatpush1.bf16.msra.mxu0 %v799
  %1239 = vmatprep.subr.bf16.mxu0 0
  %1240 = vmatpush1.bf16.msra.mxu0 %v800
  %1241 = vmatprep.mubr.bf16.mxu0 %v656
  %1242 = vmatmul.mubr.bf16.gmra.mrb[0].mxu0 %v655
  %v1243 = vpop.f32.mrb[0].mxu0
  %v1244 = vadd.f32 0.0, %v1243
  %v1245 = vpop.f32.mrb[0].mxu0
  %v1246 = vpop.f32.mrb[0].mxu0
  %v1247 = vpop.f32.mrb[0].mxu0
  %1248 = vdwg.mxu0
  %1249 = vmatprep.subr.bf16.mxu0 0
  %1250 = vmatpush1.bf16.msra.mxu0 %v801
  %1251 = vmatprep.subr.bf16.mxu0 0
  %1252 = vmatpush1.bf16.msra.mxu0 %v802
  %1253 = vmatprep.subr.bf16.mxu0 0
  %1254 = vmatpush1.bf16.msra.mxu0 %v803
  %1255 = vmatprep.subr.bf16.mxu0 0
  %1256 = vmatpush1.bf16.msra.mxu0 %v804
  %1257 = vmatprep.subr.bf16.mxu0 0
  %1258 = vmatpush1.bf16.msra.mxu0 %v805
  %1259 = vmatprep.subr.bf16.mxu0 0
  %1260 = vmatpush1.bf16.msra.mxu0 %v806
  %1261 = vmatprep.subr.bf16.mxu0 0
  %1262 = vmatpush1.bf16.msra.mxu0 %v807
  %1263 = vmatprep.subr.bf16.mxu0 0
  %1264 = vmatpush1.bf16.msra.mxu0 %v808
  %1265 = vmatprep.subr.bf16.mxu0 0
  %1266 = vmatpush1.bf16.msra.mxu0 %v809
  %1267 = vmatprep.subr.bf16.mxu0 0
  %1268 = vmatpush1.bf16.msra.mxu0 %v810
  %1269 = vmatprep.subr.bf16.mxu0 0
  %1270 = vmatpush1.bf16.msra.mxu0 %v811
  %1271 = vmatprep.subr.bf16.mxu0 0
  %1272 = vmatpush1.bf16.msra.mxu0 %v812
  %1273 = vmatprep.subr.bf16.mxu0 0
  %1274 = vmatpush1.bf16.msra.mxu0 %v813
  %1275 = vmatprep.subr.bf16.mxu0 0
  %1276 = vmatpush1.bf16.msra.mxu0 %v814
  %1277 = vmatprep.subr.bf16.mxu0 0
  %1278 = vmatpush1.bf16.msra.mxu0 %v815
  %1279 = vmatprep.subr.bf16.mxu0 0
  %1280 = vmatpush1.bf16.msra.mxu0 %v816
  %1281 = vmatprep.mubr.bf16.mxu0 %v658
  %1282 = vmatmul.mubr.bf16.gmra.mrb[0].mxu0 %v657
  %v1283 = vpop.f32.mrb[0].mxu0
  %v1284 = vadd.f32 0.0, %v1283
  %v1285 = vpop.f32.mrb[0].mxu0
  %v1286 = vpop.f32.mrb[0].mxu0
  %v1287 = vpop.f32.mrb[0].mxu0
  %1288 = vdwg.mxu0
  %1289 = vmatprep.subr.bf16.mxu0 0
  %1290 = vmatpush1.bf16.msra.mxu0 %v817
  %1291 = vmatprep.subr.bf16.mxu0 0
  %1292 = vmatpush1.bf16.msra.mxu0 %v818
  %1293 = vmatprep.subr.bf16.mxu0 0
  %1294 = vmatpush1.bf16.msra.mxu0 %v819
  %1295 = vmatprep.subr.bf16.mxu0 0
  %1296 = vmatpush1.bf16.msra.mxu0 %v820
  %1297 = vmatprep.subr.bf16.mxu0 0
  %1298 = vmatpush1.bf16.msra.mxu0 %v821
  %1299 = vmatprep.subr.bf16.mxu0 0
  %1300 = vmatpush1.bf16.msra.mxu0 %v822
  %1301 = vmatprep.subr.bf16.mxu0 0
  %1302 = vmatpush1.bf16.msra.mxu0 %v823
  %1303 = vmatprep.subr.bf16.mxu0 0
  %1304 = vmatpush1.bf16.msra.mxu0 %v824
  %1305 = vmatprep.subr.bf16.mxu0 0
  %1306 = vmatpush1.bf16.msra.mxu0 %v825
  %1307 = vmatprep.subr.bf16.mxu0 0
  %1308 = vmatpush1.bf16.msra.mxu0 %v826
  %1309 = vmatprep.subr.bf16.mxu0 0
  %1310 = vmatpush1.bf16.msra.mxu0 %v827
  %1311 = vmatprep.subr.bf16.mxu0 0
  %1312 = vmatpush1.bf16.msra.mxu0 %v828
  %1313 = vmatprep.subr.bf16.mxu0 0
  %1314 = vmatpush1.bf16.msra.mxu0 %v829
  %1315 = vmatprep.subr.bf16.mxu0 0
  %1316 = vmatpush1.bf16.msra.mxu0 %v830
  %1317 = vmatprep.subr.bf16.mxu0 0
  %1318 = vmatpush1.bf16.msra.mxu0 %v831
  %1319 = vmatprep.subr.bf16.mxu0 0
  %1320 = vmatpush1.bf16.msra.mxu0 %v832
  %1321 = vmatprep.mubr.bf16.mxu0 %v660
  %1322 = vmatmul.mubr.bf16.gmra.mrb[0].mxu0 %v659
  %v1323 = vpop.f32.mrb[0].mxu0
  %v1324 = vadd.f32 0.0, %v1323
  %v1325 = vpop.f32.mrb[0].mxu0
  %v1326 = vpop.f32.mrb[0].mxu0
  %v1327 = vpop.f32.mrb[0].mxu0
  %1328 = vdwg.mxu0
  %1329 = vmatprep.subr.bf16.mxu0 0
  %1330 = vmatpush1.bf16.msra.mxu0 %v833
  %1331 = vmatprep.subr.bf16.mxu0 0
  %1332 = vmatpush1.bf16.msra.mxu0 %v834
  %1333 = vmatprep.subr.bf16.mxu0 0
  %1334 = vmatpush1.bf16.msra.mxu0 %v835
  %1335 = vmatprep.subr.bf16.mxu0 0
  %1336 = vmatpush1.bf16.msra.mxu0 %v836
  %1337 = vmatprep.subr.bf16.mxu0 0
  %1338 = vmatpush1.bf16.msra.mxu0 %v837
  %1339 = vmatprep.subr.bf16.mxu0 0
  %1340 = vmatpush1.bf16.msra.mxu0 %v838
  %1341 = vmatprep.subr.bf16.mxu0 0
  %1342 = vmatpush1.bf16.msra.mxu0 %v839
  %1343 = vmatprep.subr.bf16.mxu0 0
  %1344 = vmatpush1.bf16.msra.mxu0 %v840
  %1345 = vmatprep.subr.bf16.mxu0 0
  %1346 = vmatpush1.bf16.msra.mxu0 %v841
  %1347 = vmatprep.subr.bf16.mxu0 0
  %1348 = vmatpush1.bf16.msra.mxu0 %v842
  %1349 = vmatprep.subr.bf16.mxu0 0
  %1350 = vmatpush1.bf16.msra.mxu0 %v843
  %1351 = vmatprep.subr.bf16.mxu0 0
  %1352 = vmatpush1.bf16.msra.mxu0 %v844
  %1353 = vmatprep.subr.bf16.mxu0 0
  %1354 = vmatpush1.bf16.msra.mxu0 %v845
  %1355 = vmatprep.subr.bf16.mxu0 0
  %1356 = vmatpush1.bf16.msra.mxu0 %v846
  %1357 = vmatprep.subr.bf16.mxu0 0
  %1358 = vmatpush1.bf16.msra.mxu0 %v847
  %1359 = vmatprep.subr.bf16.mxu0 0
  %1360 = vmatpush1.bf16.msra.mxu0 %v848
  %1361 = vmatprep.mubr.bf16.mxu0 %v662
  %1362 = vmatmul.mubr.bf16.gmra.mrb[0].mxu0 %v661
  %v1363 = vpop.f32.mrb[0].mxu0
  %v1364 = vadd.f32 0.0, %v1363
  %v1365 = vpop.f32.mrb[0].mxu0
  %v1366 = vpop.f32.mrb[0].mxu0
  %v1367 = vpop.f32.mrb[0].mxu0
  %1368 = vdwg.mxu0
  %1369 = vmatprep.subr.bf16.mxu0 0
  %1370 = vmatpush1.bf16.msra.mxu0 %v849
  %1371 = vmatprep.subr.bf16.mxu0 0
  %1372 = vmatpush1.bf16.msra.mxu0 %v850
  %1373 = vmatprep.subr.bf16.mxu0 0
  %1374 = vmatpush1.bf16.msra.mxu0 %v851
  %1375 = vmatprep.subr.bf16.mxu0 0
  %1376 = vmatpush1.bf16.msra.mxu0 %v852
  %1377 = vmatprep.subr.bf16.mxu0 0
  %1378 = vmatpush1.bf16.msra.mxu0 %v853
  %1379 = vmatprep.subr.bf16.mxu0 0
  %1380 = vmatpush1.bf16.msra.mxu0 %v854
  %1381 = vmatprep.subr.bf16.mxu0 0
  %1382 = vmatpush1.bf16.msra.mxu0 %v855
  %1383 = vmatprep.subr.bf16.mxu0 0
  %1384 = vmatpush1.bf16.msra.mxu0 %v856
  %1385 = vmatprep.subr.bf16.mxu0 0
  %1386 = vmatpush1.bf16.msra.mxu0 %v857
  %1387 = vmatprep.subr.bf16.mxu0 0
  %1388 = vmatpush1.bf16.msra.mxu0 %v858
  %1389 = vmatprep.subr.bf16.mxu0 0
  %1390 = vmatpush1.bf16.msra.mxu0 %v859
  %1391 = vmatprep.subr.bf16.mxu0 0
  %1392 = vmatpush1.bf16.msra.mxu0 %v860
  %1393 = vmatprep.subr.bf16.mxu0 0
  %1394 = vmatpush1.bf16.msra.mxu0 %v861
  %1395 = vmatprep.subr.bf16.mxu0 0
  %1396 = vmatpush1.bf16.msra.mxu0 %v862
  %1397 = vmatprep.subr.bf16.mxu0 0
  %1398 = vmatpush1.bf16.msra.mxu0 %v863
  %1399 = vmatprep.subr.bf16.mxu0 0
  %1400 = vmatpush1.bf16.msra.mxu0 %v864
  %1401 = vmatprep.mubr.bf16.mxu0 %v664
  %1402 = vmatmul.mubr.bf16.gmra.mrb[0].mxu0 %v663
  %v1403 = vpop.f32.mrb[0].mxu0
  %v1404 = vadd.f32 0.0, %v1403
  %v1405 = vpop.f32.mrb[0].mxu0
  %v1406 = vpop.f32.mrb[0].mxu0
  %v1407 = vpop.f32.mrb[0].mxu0
  %1408 = vdwg.mxu0
  %1409 = vmatprep.subr.bf16.mxu0 0
  %1410 = vmatpush1.bf16.msra.mxu0 %v865
  %1411 = vmatprep.subr.bf16.mxu0 0
  %1412 = vmatpush1.bf16.msra.mxu0 %v866
  %1413 = vmatprep.subr.bf16.mxu0 0
  %1414 = vmatpush1.bf16.msra.mxu0 %v867
  %1415 = vmatprep.subr.bf16.mxu0 0
  %1416 = vmatpush1.bf16.msra.mxu0 %v868
  %1417 = vmatprep.subr.bf16.mxu0 0
  %1418 = vmatpush1.bf16.msra.mxu0 %v869
  %1419 = vmatprep.subr.bf16.mxu0 0
  %1420 = vmatpush1.bf16.msra.mxu0 %v870
  %1421 = vmatprep.subr.bf16.mxu0 0
  %1422 = vmatpush1.bf16.msra.mxu0 %v871
  %1423 = vmatprep.subr.bf16.mxu0 0
  %1424 = vmatpush1.bf16.msra.mxu0 %v872
  %1425 = vmatprep.subr.bf16.mxu0 0
  %1426 = vmatpush1.bf16.msra.mxu0 %v873
  %1427 = vmatprep.subr.bf16.mxu0 0
  %1428 = vmatpush1.bf16.msra.mxu0 %v874
  %1429 = vmatprep.subr.bf16.mxu0 0
  %1430 = vmatpush1.bf16.msra.mxu0 %v875
  %1431 = vmatprep.subr.bf16.mxu0 0
  %1432 = vmatpush1.bf16.msra.mxu0 %v876
  %1433 = vmatprep.subr.bf16.mxu0 0
  %1434 = vmatpush1.bf16.msra.mxu0 %v877
  %1435 = vmatprep.subr.bf16.mxu0 0
  %1436 = vmatpush1.bf16.msra.mxu0 %v878
  %1437 = vmatprep.subr.bf16.mxu0 0
  %1438 = vmatpush1.bf16.msra.mxu0 %v879
  %1439 = vmatprep.subr.bf16.mxu0 0
  %1440 = vmatpush1.bf16.msra.mxu0 %v880
  %1441 = vmatprep.mubr.bf16.mxu0 %v666
  %1442 = vmatmul.mubr.bf16.gmra.mrb[0].mxu0 %v665
  %v1443 = vpop.f32.mrb[0].mxu0
  %v1444 = vadd.f32 0.0, %v1443
  %v1445 = vpop.f32.mrb[0].mxu0
  %v1446 = vpop.f32.mrb[0].mxu0
  %v1447 = vpop.f32.mrb[0].mxu0
  %1448 = vdwg.mxu0
  %1449 = vmatprep.subr.bf16.mxu0 0
  %1450 = vmatpush1.bf16.msra.mxu0 %v881
  %1451 = vmatprep.subr.bf16.mxu0 0
  %1452 = vmatpush1.bf16.msra.mxu0 %v882
  %1453 = vmatprep.subr.bf16.mxu0 0
  %1454 = vmatpush1.bf16.msra.mxu0 %v883
  %1455 = vmatprep.subr.bf16.mxu0 0
  %1456 = vmatpush1.bf16.msra.mxu0 %v884
  %1457 = vmatprep.subr.bf16.mxu0 0
  %1458 = vmatpush1.bf16.msra.mxu0 %v885
  %1459 = vmatprep.subr.bf16.mxu0 0
  %1460 = vmatpush1.bf16.msra.mxu0 %v886
  %1461 = vmatprep.subr.bf16.mxu0 0
  %1462 = vmatpush1.bf16.msra.mxu0 %v887
  %1463 = vmatprep.subr.bf16.mxu0 0
  %1464 = vmatpush1.bf16.msra.mxu0 %v888
  %1465 = vmatprep.subr.bf16.mxu0 0
  %1466 = vmatpush1.bf16.msra.mxu0 %v889
  %1467 = vmatprep.subr.bf16.mxu0 0
  %1468 = vmatpush1.bf16.msra.mxu0 %v890
  %1469 = vmatprep.subr.bf16.mxu0 0
  %1470 = vmatpush1.bf16.msra.mxu0 %v891
  %1471 = vmatprep.subr.bf16.mxu0 0
  %1472 = vmatpush1.bf16.msra.mxu0 %v892
  %1473 = vmatprep.subr.bf16.mxu0 0
  %1474 = vmatpush1.bf16.msra.mxu0 %v893
  %1475 = vmatprep.subr.bf16.mxu0 0
  %1476 = vmatpush1.bf16.msra.mxu0 %v894
  %1477 = vmatprep.subr.bf16.mxu0 0
  %1478 = vmatpush1.bf16.msra.mxu0 %v895
  %1479 = vmatprep.subr.bf16.mxu0 0
  %1480 = vmatpush1.bf16.msra.mxu0 %v896
  %1481 = vmatprep.mubr.bf16.mxu0 %v668
  %1482 = vmatmul.mubr.bf16.gmra.mrb[0].mxu0 %v667
  %v1483 = vpop.f32.mrb[0].mxu0
  %v1484 = vadd.f32 0.0, %v1483
  %v1485 = vpop.f32.mrb[0].mxu0
  %v1486 = vpop.f32.mrb[0].mxu0
  %v1487 = vpop.f32.mrb[0].mxu0
  %1488 = vdwg.mxu0
  %1489 = vmatprep.subr.bf16.mxu0 0
  %1490 = vmatpush1.bf16.msra.mxu0 %v897
  %1491 = vmatprep.subr.bf16.mxu0 0
  %1492 = vmatpush1.bf16.msra.mxu0 %v898
  %1493 = vmatprep.subr.bf16.mxu0 0
  %1494 = vmatpush1.bf16.msra.mxu0 %v899
  %1495 = vmatprep.subr.bf16.mxu0 0
  %1496 = vmatpush1.bf16.msra.mxu0 %v900
  %1497 = vmatprep.subr.bf16.mxu0 0
  %1498 = vmatpush1.bf16.msra.mxu0 %v901
  %1499 = vmatprep.subr.bf16.mxu0 0
  %1500 = vmatpush1.bf16.msra.mxu0 %v902
  %1501 = vmatprep.subr.bf16.mxu0 0
  %1502 = vmatpush1.bf16.msra.mxu0 %v903
  %1503 = vmatprep.subr.bf16.mxu0 0
  %1504 = vmatpush1.bf16.msra.mxu0 %v904
  %1505 = vmatprep.subr.bf16.mxu0 0
  %1506 = vmatpush1.bf16.msra.mxu0 %v905
  %1507 = vmatprep.subr.bf16.mxu0 0
  %1508 = vmatpush1.bf16.msra.mxu0 %v906
  %1509 = vmatprep.subr.bf16.mxu0 0
  %1510 = vmatpush1.bf16.msra.mxu0 %v907
  %1511 = vmatprep.subr.bf16.mxu0 0
  %1512 = vmatpush1.bf16.msra.mxu0 %v908
  %1513 = vmatprep.subr.bf16.mxu0 0
  %1514 = vmatpush1.bf16.msra.mxu0 %v909
  %1515 = vmatprep.subr.bf16.mxu0 0
  %1516 = vmatpush1.bf16.msra.mxu0 %v910
  %1517 = vmatprep.subr.bf16.mxu0 0
  %1518 = vmatpush1.bf16.msra.mxu0 %v911
  %1519 = vmatprep.subr.bf16.mxu0 0
  %1520 = vmatpush1.bf16.msra.mxu0 %v912
  %1521 = vmatprep.mubr.bf16.mxu0 %v670
  %1522 = vmatmul.mubr.bf16.gmra.mrb[0].mxu0 %v669
  %v1523 = vpop.f32.mrb[0].mxu0
  %v1524 = vadd.f32 0.0, %v1523
  %v1525 = vpop.f32.mrb[0].mxu0
  %v1526 = vpop.f32.mrb[0].mxu0
  %v1527 = vpop.f32.mrb[0].mxu0
  %1528 = vdwg.mxu0
  %1529 = vmatprep.subr.bf16.mxu0 0
  %1530 = vmatpush1.bf16.msra.mxu0 %v913
  %1531 = vmatprep.subr.bf16.mxu0 0
  %1532 = vmatpush1.bf16.msra.mxu0 %v914
  %1533 = vmatprep.subr.bf16.mxu0 0
  %1534 = vmatpush1.bf16.msra.mxu0 %v915
  %1535 = vmatprep.subr.bf16.mxu0 0
  %1536 = vmatpush1.bf16.msra.mxu0 %v916
  %1537 = vmatprep.subr.bf16.mxu0 0
  %1538 = vmatpush1.bf16.msra.mxu0 %v917
  %1539 = vmatprep.subr.bf16.mxu0 0
  %1540 = vmatpush1.bf16.msra.mxu0 %v918
  %1541 = vmatprep.subr.bf16.mxu0 0
  %1542 = vmatpush1.bf16.msra.mxu0 %v919
  %1543 = vmatprep.subr.bf16.mxu0 0
  %1544 = vmatpush1.bf16.msra.mxu0 %v920
  %1545 = vmatprep.subr.bf16.mxu0 0
  %1546 = vmatpush1.bf16.msra.mxu0 %v921
  %1547 = vmatprep.subr.bf16.mxu0 0
  %1548 = vmatpush1.bf16.msra.mxu0 %v922
  %1549 = vmatprep.subr.bf16.mxu0 0
  %1550 = vmatpush1.bf16.msra.mxu0 %v923
  %1551 = vmatprep.subr.bf16.mxu0 0
  %1552 = vmatpush1.bf16.msra.mxu0 %v924
  %1553 = vmatprep.subr.bf16.mxu0 0
  %1554 = vmatpush1.bf16.msra.mxu0 %v925
  %1555 = vmatprep.subr.bf16.mxu0 0
  %1556 = vmatpush1.bf16.msra.mxu0 %v926
  %1557 = vmatprep.subr.bf16.mxu0 0
  %1558 = vmatpush1.bf16.msra.mxu0 %v927
  %1559 = vmatprep.subr.bf16.mxu0 0
  %1560 = vmatpush1.bf16.msra.mxu0 %v928
  %1561 = vmatprep.mubr.bf16.mxu0 %v672
  %1562 = vmatmul.mubr.bf16.gmra.mrb[0].mxu0 %v671
  %v1563 = vpop.f32.mrb[0].mxu0
  %v1564 = vadd.f32 0.0, %v1563
  %v1565 = vpop.f32.mrb[0].mxu0
  %v1566 = vpop.f32.mrb[0].mxu0
  %v1567 = vpop.f32.mrb[0].mxu0
  %1568 = vdwg.mxu0
  %vm1569 = vcmask 1040384
  %v1570 = vsel %vm1569, %v964, 0.0
  %v1571 = vsel %vm1569, %v1004, 0.0
  %v1572 = vadd.f32 %v1570, %v1571
  %v1573 = vsel %vm1569, %v1044, 0.0
  %v1574 = vadd.f32 %v1572, %v1573
  %v1575 = vsel %vm1569, %v1084, 0.0
  %v1576 = vadd.f32 %v1574, %v1575
  %v1577 = vsel %vm1569, %v1124, 0.0
  %v1578 = vadd.f32 %v1576, %v1577
  %v1579 = vsel %vm1569, %v1164, 0.0
  %v1580 = vadd.f32 %v1578, %v1579
  %v1581 = vsel %vm1569, %v1204, 0.0
  %v1582 = vadd.f32 %v1580, %v1581
  %v1583 = vsel %vm1569, %v1244, 0.0
  %v1584 = vadd.f32 %v1582, %v1583
  %v1585 = vsel %vm1569, %v1284, 0.0
  %v1586 = vadd.f32 %v1584, %v1585
  %v1587 = vsel %vm1569, %v1324, 0.0
  %v1588 = vadd.f32 %v1586, %v1587
  %v1589 = vsel %vm1569, %v1364, 0.0
  %v1590 = vadd.f32 %v1588, %v1589
  %v1591 = vsel %vm1569, %v1404, 0.0
  %v1592 = vadd.f32 %v1590, %v1591
  %v1593 = vsel %vm1569, %v1444, 0.0
  %v1594 = vadd.f32 %v1592, %v1593
  %v1595 = vsel %vm1569, %v1484, 0.0
  %v1596 = vadd.f32 %v1594, %v1595
  %v1597 = vsel %vm1569, %v1524, 0.0
  %v1598 = vadd.f32 %v1596, %v1597
  %v1599 = vsel %vm1569, %v1564, 0.0
  %v1600 = vadd.f32 %v1598, %v1599
  %v1601 = vsub.f32 0.0, %v1600
  %v1602 = vmul.f32 %v1601, 1.442695
  %v1603 = vpow.pop %v1602
  %v1604 = vadd.f32 %v1603, 1.0
  %v1605 = vrcp.pop %v1604
  %v1606 = vmul.f32 1.0, %v1605
  %v1607 = vmul.f32 %v1600, %v1606
  %v1608 = vpack.c.bf16 %v1607, %v1607
  %v1609 = vld [vmem:[%s6] sm:$0xf]
  %v1610 = vld [vmem:[%s6 + $0x4] sm:$0xf]
  %v1611 = vld [vmem:[%s6 + $0x8] sm:$0xf]
  %v1612 = vld [vmem:[%s6 + $0xc] sm:$0xf]
  %v1613 = vld [vmem:[%s6 + $0x10] sm:$0xf]
  %v1614 = vld [vmem:[%s6 + $0x14] sm:$0xf]
  %v1615 = vld [vmem:[%s6 + $0x18] sm:$0xf]
  %v1616 = vld [vmem:[%s6 + $0x1c] sm:$0xf]
  %v1617 = vld [vmem:[%s6 + $0x20] sm:$0xf]
  %v1618 = vld [vmem:[%s6 + $0x24] sm:$0xf]
  %v1619 = vld [vmem:[%s6 + $0x28] sm:$0xf]
  %v1620 = vld [vmem:[%s6 + $0x2c] sm:$0xf]
  %v1621 = vld [vmem:[%s6 + $0x30] sm:$0xf]
  %v1622 = vld [vmem:[%s6 + $0x34] sm:$0xf]
  %v1623 = vld [vmem:[%s6 + $0x38] sm:$0xf]
  %v1624 = vld [vmem:[%s6 + $0x3c] sm:$0xf]
  %v1641 = vunpack.c.l.b16 %v1609
  %v1642 = vunpack.c.l.b16 %v1610
  %v1643 = vunpack.c.l.b16 %v1611
  %v1644 = vunpack.c.l.b16 %v1612
  %v1645 = vunpack.c.l.b16 %v1613
  %v1646 = vunpack.c.l.b16 %v1614
  %v1647 = vunpack.c.l.b16 %v1615
  %v1648 = vunpack.c.l.b16 %v1616
  %v1649 = vunpack.c.l.b16 %v1617
  %v1650 = vunpack.c.l.b16 %v1618
  %v1651 = vunpack.c.l.b16 %v1619
  %v1652 = vunpack.c.l.b16 %v1620
  %v1653 = vunpack.c.l.b16 %v1621
  %v1654 = vunpack.c.l.b16 %v1622
  %v1655 = vunpack.c.l.b16 %v1623
  %v1656 = vunpack.c.l.b16 %v1624
  %v1657 = vpack.c.b16 %v1642, %v1641
  %v1658 = vpack.c.b16 %v1644, %v1643
  %v1659 = vpack.c.b16 %v1646, %v1645
  %v1660 = vpack.c.b16 %v1648, %v1647
  %v1661 = vpack.c.b16 %v1650, %v1649
  %v1662 = vpack.c.b16 %v1652, %v1651
  %v1663 = vpack.c.b16 %v1654, %v1653
  %v1664 = vpack.c.b16 %v1656, %v1655
  %1673 = vmatprep.subr.bf16.mxu0 0
  %1674 = vmatpush1.bf16.msra.mxu0 %v1657
  %1675 = vmatprep.subr.bf16.mxu0 0
  %1676 = vmatpush1.bf16.msra.mxu0 %v1658
  %1677 = vmatprep.subr.bf16.mxu0 0
  %1678 = vmatpush1.bf16.msra.mxu0 %v1659
  %1679 = vmatprep.subr.bf16.mxu0 0
  %1680 = vmatpush1.bf16.msra.mxu0 %v1660
  %1681 = vmatprep.subr.bf16.mxu0 0
  %1682 = vmatpush1.bf16.msra.mxu0 %v1661
  %1683 = vmatprep.subr.bf16.mxu0 0
  %1684 = vmatpush1.bf16.msra.mxu0 %v1662
  %1685 = vmatprep.subr.bf16.mxu0 0
  %1686 = vmatpush1.bf16.msra.mxu0 %v1663
  %1687 = vmatprep.subr.bf16.mxu0 0
  %1688 = vmatpush1.bf16.msra.mxu0 %v1664
  %1689 = vmatprep.subr.bf16.mxu0 0
  %1690 = vmatpush1.bf16.msra.mxu0 0
  %1691 = vmatprep.subr.bf16.mxu0 0
  %1692 = vmatpush1.bf16.msra.mxu0 0
  %1693 = vmatprep.subr.bf16.mxu0 0
  %1694 = vmatpush1.bf16.msra.mxu0 0
  %1695 = vmatprep.subr.bf16.mxu0 0
  %1696 = vmatpush1.bf16.msra.mxu0 0
  %1697 = vmatprep.subr.bf16.mxu0 0
  %1698 = vmatpush1.bf16.msra.mxu0 0
  %1699 = vmatprep.subr.bf16.mxu0 0
  %1700 = vmatpush1.bf16.msra.mxu0 0
  %1701 = vmatprep.subr.bf16.mxu0 0
  %1702 = vmatpush1.bf16.msra.mxu0 0
  %1703 = vmatprep.subr.bf16.mxu0 0
  %1704 = vmatpush1.bf16.msra.mxu0 0
  %1705 = vmatprep.mubr.bf16.mxu0 0
  %1706 = vmatmul.mubr.bf16.gmra.mrb[0].mxu0 %v1608
  %v1707 = vpop.f32.mrb[0].mxu0
  %v1708 = vadd.f32 0.0, %v1707
  %v1709 = vpop.f32.mrb[0].mxu0
  %v1710 = vpop.f32.mrb[0].mxu0
  %v1711 = vpop.f32.mrb[0].mxu0
  %1712 = vdwg.mxu0
  %v1713 = vsub.f32 0.0, %v1708
  %v1714 = vmul.f32 %v1713, 1.442695
  %v1715 = vpow.pop %v1714
  %v1716 = vadd.f32 %v1715, 1.0
  %v1717 = vrcp.pop %v1716
  %v1718 = vmul.f32 1.0, %v1717
  %v1719 = vmul.f32 %v1708, %v1718
  %v1720 = vpack.c.bf16 %v1719, %v1719
  %v1721 = vld [vmem:[%s7] sm:$0xf]
  %v1722 = vld [vmem:[%s7 + $0x4] sm:$0xf]
  %v1723 = vld [vmem:[%s7 + $0x8] sm:$0xf]
  %v1724 = vld [vmem:[%s7 + $0xc] sm:$0xf]
  %v1725 = vld [vmem:[%s7 + $0x10] sm:$0xf]
  %v1726 = vld [vmem:[%s7 + $0x14] sm:$0xf]
  %v1727 = vld [vmem:[%s7 + $0x18] sm:$0xf]
  %v1728 = vld [vmem:[%s7 + $0x1c] sm:$0xf]
  %v1729 = vld [vmem:[%s7 + $0x20] sm:$0xf]
  %v1730 = vld [vmem:[%s7 + $0x24] sm:$0xf]
  %v1731 = vld [vmem:[%s7 + $0x28] sm:$0xf]
  %v1732 = vld [vmem:[%s7 + $0x2c] sm:$0xf]
  %v1733 = vld [vmem:[%s7 + $0x30] sm:$0xf]
  %v1734 = vld [vmem:[%s7 + $0x34] sm:$0xf]
  %v1735 = vld [vmem:[%s7 + $0x38] sm:$0xf]
  %v1736 = vld [vmem:[%s7 + $0x3c] sm:$0xf]
  %v1753 = vunpack.c.l.b16 %v1721
  %v1754 = vunpack.c.l.b16 %v1722
  %v1755 = vunpack.c.l.b16 %v1723
  %v1756 = vunpack.c.l.b16 %v1724
  %v1757 = vunpack.c.l.b16 %v1725
  %v1758 = vunpack.c.l.b16 %v1726
  %v1759 = vunpack.c.l.b16 %v1727
  %v1760 = vunpack.c.l.b16 %v1728
  %v1761 = vunpack.c.l.b16 %v1729
  %v1762 = vunpack.c.l.b16 %v1730
  %v1763 = vunpack.c.l.b16 %v1731
  %v1764 = vunpack.c.l.b16 %v1732
  %v1765 = vunpack.c.l.b16 %v1733
  %v1766 = vunpack.c.l.b16 %v1734
  %v1767 = vunpack.c.l.b16 %v1735
  %v1768 = vunpack.c.l.b16 %v1736
  %v1769 = vpack.c.b16 %v1754, %v1753
  %v1770 = vpack.c.b16 %v1756, %v1755
  %v1771 = vpack.c.b16 %v1758, %v1757
  %v1772 = vpack.c.b16 %v1760, %v1759
  %v1773 = vpack.c.b16 %v1762, %v1761
  %v1774 = vpack.c.b16 %v1764, %v1763
  %v1775 = vpack.c.b16 %v1766, %v1765
  %v1776 = vpack.c.b16 %v1768, %v1767
  %1785 = vmatprep.subr.bf16.mxu0 0
  %1786 = vmatpush1.bf16.msra.mxu0 %v1769
  %1787 = vmatprep.subr.bf16.mxu0 0
  %1788 = vmatpush1.bf16.msra.mxu0 %v1770
  %1789 = vmatprep.subr.bf16.mxu0 0
  %1790 = vmatpush1.bf16.msra.mxu0 %v1771
  %1791 = vmatprep.subr.bf16.mxu0 0
  %1792 = vmatpush1.bf16.msra.mxu0 %v1772
  %1793 = vmatprep.subr.bf16.mxu0 0
  %1794 = vmatpush1.bf16.msra.mxu0 %v1773
  %1795 = vmatprep.subr.bf16.mxu0 0
  %1796 = vmatpush1.bf16.msra.mxu0 %v1774
  %1797 = vmatprep.subr.bf16.mxu0 0
  %1798 = vmatpush1.bf16.msra.mxu0 %v1775
  %1799 = vmatprep.subr.bf16.mxu0 0
  %1800 = vmatpush1.bf16.msra.mxu0 %v1776
  %1801 = vmatprep.subr.bf16.mxu0 0
  %1802 = vmatpush1.bf16.msra.mxu0 0
  %1803 = vmatprep.subr.bf16.mxu0 0
  %1804 = vmatpush1.bf16.msra.mxu0 0
  %1805 = vmatprep.subr.bf16.mxu0 0
  %1806 = vmatpush1.bf16.msra.mxu0 0
  %1807 = vmatprep.subr.bf16.mxu0 0
  %1808 = vmatpush1.bf16.msra.mxu0 0
  %1809 = vmatprep.subr.bf16.mxu0 0
  %1810 = vmatpush1.bf16.msra.mxu0 0
  %1811 = vmatprep.subr.bf16.mxu0 0
  %1812 = vmatpush1.bf16.msra.mxu0 0
  %1813 = vmatprep.subr.bf16.mxu0 0
  %1814 = vmatpush1.bf16.msra.mxu0 0
  %1815 = vmatprep.subr.bf16.mxu0 0
  %1816 = vmatpush1.bf16.msra.mxu0 0
  %1817 = vmatprep.mubr.bf16.mxu0 0
  %1818 = vmatmul.mubr.bf16.gmra.mrb[0].mxu0 %v1720
  %v1819 = vpop.f32.mrb[0].mxu0
  %v1820 = vadd.f32 0.0, %v1819
  %v1821 = vpop.f32.mrb[0].mxu0
  %v1822 = vpop.f32.mrb[0].mxu0
  %v1823 = vpop.f32.mrb[0].mxu0
  %1824 = vdwg.mxu0
  %1825 = vst [vmem:[%s8] sm:$0x1] %v1820
  // Predicated region
  $region34: #{deep_q_forward.1} parent=0 // pred_check
    _
  $region35: #{deep_q_forward.1} parent=0 // pred_check_branch
    %1827 = sbr.rel (0) target = $region37
  $region36: #{deep_q_forward.1} parent=0 // pred_region
    _
  $region37: #{deep_q_forward.1} parent=0 // pred_fallthru
    _
  // Predicated region
  $region38: #{deep_q_forward.1} parent=0 // pred_check
    _
  $region39: #{deep_q_forward.1} parent=0 // pred_check_branch
    %1829 = sbr.rel (0) target = $region41
  $region40: #{deep_q_forward.1} parent=0 // pred_region
    _
  $region41: #{deep_q_forward.1} parent=0 // pred_fallthru
    _
  %1830 = vsyncmov [#allocation3]
  %s1831 = vpop.sfrf %1830
  %p1832 = scmp.eq.s32.totalorder %s1831, 0
  %p1833 = pneg %p1832
  %1835 = shalt.err (%p1833)

</llo_original>
